<compile_context>
chip_gen: v5e
topology: v5e:2x2
jax: 0.10.0
libtpu: 0.0.40
codegen_flags: <defaults>
</compile_context>

<pallas_src>
import functools

import jax
import jax.numpy as jnp
from jax.experimental import pallas as pl
from jax.experimental.pallas import tpu as pltpu

HIDDEN = 768          # XLNet-base hidden size (matches nn.Linear(768, 5))
NUM_CLASSES = 5
LANE = 128            # class dim padded to one lane-dense tile


def _gather_fc_kernel(xlen_ref, reps_hbm, w_ref, b_ref, out_ref,
                      buf, sems, *, tb, batch, seq, n_inner):
    """One grid step handles `tb` batch rows (one tile).

    Double-buffered gather: tile `i+1`'s per-row (1, H) DMAs are started into
    the other slot before waiting on tile `i`, then a single (tb, H) @ (H, 128)
    matmul + bias is stored lane-dense.
    """
    o = pl.program_id(0)            # "parallel" axis (v7x: split across 2 TCs)
    i = pl.program_id(1)            # "arbitrary" axis (sequential per core)
    tile = o * n_inner + i
    slot = i % 2
    nxt = 1 - slot
    rem = batch % tb                # static: #valid rows in the partial tile

    def start_rows(tile_idx, slot_idx):
        # One (1, H) gather DMA per batch row: reps[b, x_len[b]-1, :].
        for r in range(tb):
            def _start(r=r):
                gb = tile_idx * tb + r
                xl = xlen_ref[gb]
                # Match reps[arange(B), x_len - 1]: x_len == 0 wraps to the
                # LAST token (negative-index semantics of the reference);
                # clamp keeps any out-of-range x_len inside [0, seq).
                si = jnp.where(xl >= 1, xl - 1, seq - 1)
                si = jnp.clip(si, 0, seq - 1)
                pltpu.make_async_copy(
                    reps_hbm.at[gb, pl.ds(si, 1), :],
                    buf.at[slot_idx, pl.ds(r, 1), :],
                    sems.at[slot_idx]).start()
            if rem != 0 and r >= rem:
                # Only the last (partial) tile can have these rows OOB.
                pl.when(tile_idx * tb + r < batch)(_start)
            else:
                _start()

    def wait_rows(tile_idx, slot_idx):
        for r in range(tb):
            def _wait(r=r):
                pltpu.make_async_copy(
                    reps_hbm.at[0, pl.ds(0, 1), :],     # shape-only (wait amount)
                    buf.at[slot_idx, pl.ds(r, 1), :],
                    sems.at[slot_idx]).wait()
            if rem != 0 and r >= rem:
                pl.when(tile_idx * tb + r < batch)(_wait)
            else:
                _wait()

    # Prime this core's pipeline on its first sequential step.
    @pl.when(i == 0)
    def _():
        start_rows(tile, 0)

    # Prefetch the NEXT tile's rows into the other slot before waiting on the
    # current tile: scalar x_len reads stay ahead of the DMA wait, and the
    # next tile's gather latency hides under this tile's matmul + writeback.
    if n_inner > 1:
        @pl.when(i + 1 < n_inner)
        def _():
            start_rows(o * n_inner + i + 1, nxt)

    wait_rows(tile, slot)

    logits = jnp.dot(buf[slot], w_ref[...], preferred_element_type=jnp.float32)
    out_ref[...] = (logits + b_ref[...]).astype(out_ref.dtype)


def _pick_tb(batch):
    """Rows per grid step: large enough to amortize ~0.35us step overhead and
    keep many gather DMAs in flight, a multiple of 8 for (8,128) output tiles,
    and (when possible) yielding an EVEN tile count so v7x can split the
    parallel axis across both TensorCores."""
    if batch <= 8:
        return 8
    for tb in (64, 32, 24, 16, 8):
        if tb <= batch and pl.cdiv(batch, tb) % 2 == 0:
            return tb
    return 32


def _grid_split(n_tiles):
    """Exact (outer, inner) factorization: outer is the 'parallel' axis."""
    if n_tiles >= 2 and n_tiles % 2 == 0:
        return 2, n_tiles // 2
    return 1, n_tiles


@jax.jit
def xlnet_mlp_head(reps, x_len, w_t, bias):
    """reps: [B, S, H], x_len: [B] int, w_t: [H, 5], bias: [5] -> logits [B, 5]."""
    B, S, H = reps.shape
    tb = _pick_tb(B)
    n_tiles = pl.cdiv(B, tb)
    n_outer, n_inner = _grid_split(n_tiles)

    # Pad classes to one lane-dense 128-wide tile (unmasked vst).  Weight tile
    # in the activation dtype (bf16 x bf16 -> f32-acc on MXU when reps are
    # bf16); bias stays f32 and is added to the f32 accumulator.  Under jit
    # these pads are compiled once, not relaunched per call.
    wd = reps.dtype
    w_pad = jnp.zeros((H, LANE), wd).at[:, :NUM_CLASSES].set(w_t.astype(wd))
    b_pad = jnp.zeros((1, LANE), jnp.float32).at[0, :NUM_CLASSES].set(
        bias.astype(jnp.float32).reshape(-1))

    kernel = functools.partial(_gather_fc_kernel, tb=tb, batch=B, seq=S,
                               n_inner=n_inner)

    grid_spec = pltpu.PrefetchScalarGridSpec(
        num_scalar_prefetch=1,                     # x_len -> SMEM
        grid=(n_outer, n_inner),
        in_specs=[
            pl.BlockSpec(memory_space=pl.ANY),     # reps stay in HBM; DMA gather
            # Resident weight/bias (constant index_map).  NOTE: pipeline_mode=
            # pl.Buffered(1) would drop their redundant second buffer
            # (~384 KiB); left at default for broad jax-version compatibility.
            pl.BlockSpec((H, LANE), lambda o, i, xlen: (0, 0)),
            pl.BlockSpec((1, LANE), lambda o, i, xlen: (0, 0)),
        ],
        out_specs=pl.BlockSpec((tb, LANE),
                               lambda o, i, xlen: (o * n_inner + i, 0)),
        scratch_shapes=[
            pltpu.VMEM((2, tb, H), reps.dtype),    # double-buffered gather staging
            pltpu.SemaphoreType.DMA((2,)),         # one shared DMA sem per slot
        ],
    )

    logits_pad = pl.pallas_call(
        kernel,
        out_shape=jax.ShapeDtypeStruct((n_tiles * tb, LANE), jnp.float32),
        grid_spec=grid_spec,
        compiler_params=pltpu.CompilerParams(
            dimension_semantics=("parallel", "arbitrary")),
    )(x_len.astype(jnp.int32), reps, w_pad, b_pad)

    return logits_pad[:B, :NUM_CLASSES]


def stub_backbone(x, key):
    """Deterministic stand-in for XLNetModel.from_pretrained(...): maps token
    ids to [B, S, HIDDEN] hidden states via a fixed random embedding table."""
    vocab = 64
    emb = jax.random.normal(key, (vocab, HIDDEN), dtype=jnp.float32) * 0.02
    return emb[x]  # [B, S, HIDDEN]


def _ref_head(reps, x_len, w_t, bias):
    """Plain-JAX reference: same semantics as the PyTorch forward tail."""
    B = reps.shape[0]
    cls_rep = reps[jnp.arange(B), x_len - 1]               # negative idx wraps
    return cls_rep @ w_t + bias


if __name__ == "__main__":
    key = jax.random.PRNGKey(0)
    k_emb, k_tok, k_w, k_b = jax.random.split(key, 4)

    # fc = nn.Linear(768, 5): weight (5, 768), bias (5,)
    fc_w = jax.random.normal(k_w, (NUM_CLASSES, HIDDEN), dtype=jnp.float32) * 0.02
    fc_b = jax.random.normal(k_b, (NUM_CLASSES,), dtype=jnp.float32) * 0.02
    w_t = fc_w.T                                            # [768, 5]

    # ---- Test 1: tiny batch (single tile, partial-tile row guards) ----
    B, S = 2, 8
    PAD_ID = 0
    x = jax.random.randint(k_tok, (B, S), 1, 64, dtype=jnp.int32)
    x_len = jnp.array([S, S - 3], dtype=jnp.int32)
    pos = jnp.arange(S)[None, :]
    x = jnp.where(pos < x_len[:, None], x, PAD_ID)          # pad -> attention_mask
    reps = stub_backbone(x, k_emb)                          # [B, S, 768]

    logits = jax.block_until_ready(xlnet_mlp_head(reps, x_len, w_t, fc_b))
    ref = _ref_head(reps, x_len, w_t, fc_b)
    assert logits.shape == (B, NUM_CLASSES)
    assert jnp.allclose(logits, ref, atol=1e-4, rtol=1e-4)

    # ---- Test 2: larger batch (2-D grid, double-buffered gathers, x_len==0) ----
    B2, S2 = 200, 16
    k1, k2 = jax.random.split(jax.random.PRNGKey(1))
    reps2 = jax.random.normal(k1, (B2, S2, HIDDEN), dtype=jnp.float32) * 0.1
    x_len2 = jax.random.randint(k2, (B2,), 0, S2 + 1, dtype=jnp.int32)

    logits2 = jax.block_until_ready(xlnet_mlp_head(reps2, x_len2, w_t, fc_b))
    ref2 = _ref_head(reps2, x_len2, w_t, fc_b)
    assert logits2.shape == (B2, NUM_CLASSES)
    assert jnp.allclose(logits2, ref2, atol=1e-3, rtol=1e-3)

    print("KERNEL_OK")
</pallas_src>

<mosaic_0001>
module attributes {stable_mosaic.version = 11 : i64} {
  func.func @_gather_fc_kernel(%arg0: i32, %arg1: i32, %arg2: memref<2xi32, #tpu.memory_space<smem>>, %arg3: memref<2x8x768xf32, #tpu.memory_space<any>>, %arg4: memref<768x128xf32, #tpu.memory_space<vmem>>, %arg5: memref<1x128xf32, #tpu.memory_space<vmem>>, %arg6: memref<8x128xf32, #tpu.memory_space<vmem>>, %arg7: memref<2x8x768xf32, #tpu.memory_space<vmem>>, %arg8: memref<2x!tpu.dma_semaphore, #tpu.memory_space<semaphore_mem>>) attributes {dimension_semantics = [#tpu.dimension_semantics<parallel>, #tpu.dimension_semantics<arbitrary>], iteration_bounds = array<i64: 1, 1>, scalar_prefetch = 1 : i64, scratch_operands = 2 : i64, tpu.core_type = #tpu.core_type<tc>, window_params = [{}, {pipeline_mode = #tpu.pipeline_mode<synchronous>, transform_indices = @transform_1, window_bounds = array<i64: 768, 128>}, {pipeline_mode = #tpu.pipeline_mode<synchronous>, transform_indices = @transform_2, window_bounds = array<i64: 1, 128>}, {transform_indices = @transform_3, window_bounds = array<i64: 8, 128>}]} {
    %c1_i32 = arith.constant 1 : i32
    %0 = arith.muli %arg0, %c1_i32 : i32
    %1 = arith.addi %0, %arg1 : i32
    %c2_i32 = arith.constant 2 : i32
    %c0_i32 = arith.constant 0 : i32
    %2 = arith.cmpi eq, %c2_i32, %c0_i32 : i32
    %c1_i32_0 = arith.constant 1 : i32
    %3 = arith.select %2, %c1_i32_0, %c2_i32 : i32
    %4 = arith.remsi %arg1, %3 : i32
    %c0_i32_1 = arith.constant 0 : i32
    %5 = arith.cmpi ne, %4, %c0_i32_1 : i32
    %c0_i32_2 = arith.constant 0 : i32
    %6 = arith.cmpi slt, %4, %c0_i32_2 : i32
    %c0_i32_3 = arith.constant 0 : i32
    %7 = arith.cmpi slt, %3, %c0_i32_3 : i32
    %8 = arith.xori %6, %7 : i1
    %9 = arith.andi %8, %5 : i1
    %10 = arith.addi %4, %3 : i32
    %11 = arith.select %9, %10, %4 : i32
    %c0_i32_4 = arith.constant 0 : i32
    %12 = arith.cmpi eq, %arg1, %c0_i32_4 : i32
    %13 = arith.extui %12 : i1 to i32
    %c0_i32_5 = arith.constant 0 : i32
    %14 = arith.cmpi ne, %13, %c0_i32_5 : i32
    scf.if %14 {
      %c8_i32_41 = arith.constant 8 : i32
      %66 = arith.muli %1, %c8_i32_41 : i32
      %c0_i32_42 = arith.constant 0 : i32
      %67 = arith.addi %66, %c0_i32_42 : i32
      %68 = arith.index_cast %67 : i32 to index
      %69 = memref.load %arg2[%68] : memref<2xi32, #tpu.memory_space<smem>>
      %c1_i32_43 = arith.constant 1 : i32
      %70 = arith.cmpi sge, %69, %c1_i32_43 : i32
      %c1_i32_44 = arith.constant 1 : i32
      %71 = arith.subi %69, %c1_i32_44 : i32
      %c7_i32_45 = arith.constant 7 : i32
      %72 = arith.select %70, %71, %c7_i32_45 : i32
      %c0_i32_46 = arith.constant 0 : i32
      %c7_i32_47 = arith.constant 7 : i32
      %73 = arith.maxsi %c0_i32_46, %72 : i32
      %74 = arith.minsi %c7_i32_47, %73 : i32
      %c0_i32_48 = arith.constant 0 : i32
      %c0_i32_49 = arith.constant 0 : i32
      %c0_i32_50 = arith.constant 0 : i32
      %75 = tpu.memref_slice %arg3[%67, %74, %c0_i32_50] : memref<2x8x768xf32, #tpu.memory_space<any>> -> memref<1x1x768xf32, #tpu.memory_space<any>>
      %76 = tpu.memref_squeeze %75 : memref<1x1x768xf32, #tpu.memory_space<any>> -> memref<1x768xf32, #tpu.memory_space<any>>
      %c0_i32_51 = arith.constant 0 : i32
      %c0_i32_52 = arith.constant 0 : i32
      %77 = tpu.memref_slice %arg7[%c0_i32_48, %c0_i32_51, %c0_i32_52] : memref<2x8x768xf32, #tpu.memory_space<vmem>> -> memref<1x1x768xf32, #tpu.memory_space<vmem>>
      %78 = tpu.memref_squeeze %77 : memref<1x1x768xf32, #tpu.memory_space<vmem>> -> memref<1x768xf32, #tpu.memory_space<vmem>>
      %79 = tpu.memref_slice %arg8[%c0_i32_49] : memref<2x!tpu.dma_semaphore, #tpu.memory_space<semaphore_mem>> -> memref<1x!tpu.dma_semaphore, #tpu.memory_space<semaphore_mem>>
      %80 = tpu.memref_squeeze %79 : memref<1x!tpu.dma_semaphore, #tpu.memory_space<semaphore_mem>> -> memref<!tpu.dma_semaphore, #tpu.memory_space<semaphore_mem>>
      tpu.enqueue_dma source(%76 : memref<1x768xf32, #tpu.memory_space<any>>) target(%78 : memref<1x768xf32, #tpu.memory_space<vmem>>) target_semaphore(%80 : memref<!tpu.dma_semaphore, #tpu.memory_space<semaphore_mem>>)
      %c8_i32_53 = arith.constant 8 : i32
      %81 = arith.muli %1, %c8_i32_53 : i32
      %c1_i32_54 = arith.constant 1 : i32
      %82 = arith.addi %81, %c1_i32_54 : i32
      %83 = arith.index_cast %82 : i32 to index
      %84 = memref.load %arg2[%83] : memref<2xi32, #tpu.memory_space<smem>>
      %c1_i32_55 = arith.constant 1 : i32
      %85 = arith.cmpi sge, %84, %c1_i32_55 : i32
      %c1_i32_56 = arith.constant 1 : i32
      %86 = arith.subi %84, %c1_i32_56 : i32
      %c7_i32_57 = arith.constant 7 : i32
      %87 = arith.select %85, %86, %c7_i32_57 : i32
      %c0_i32_58 = arith.constant 0 : i32
      %c7_i32_59 = arith.constant 7 : i32
      %88 = arith.maxsi %c0_i32_58, %87 : i32
      %89 = arith.minsi %c7_i32_59, %88 : i32
      %c0_i32_60 = arith.constant 0 : i32
      %c0_i32_61 = arith.constant 0 : i32
      %c0_i32_62 = arith.constant 0 : i32
      %90 = tpu.memref_slice %arg3[%82, %89, %c0_i32_62] : memref<2x8x768xf32, #tpu.memory_space<any>> -> memref<1x1x768xf32, #tpu.memory_space<any>>
      %91 = tpu.memref_squeeze %90 : memref<1x1x768xf32, #tpu.memory_space<any>> -> memref<1x768xf32, #tpu.memory_space<any>>
      %c1_i32_63 = arith.constant 1 : i32
      %c0_i32_64 = arith.constant 0 : i32
      %92 = tpu.memref_slice %arg7[%c0_i32_60, %c1_i32_63, %c0_i32_64] : memref<2x8x768xf32, #tpu.memory_space<vmem>> -> memref<1x1x768xf32, #tpu.memory_space<vmem>>
      %93 = tpu.memref_squeeze %92 : memref<1x1x768xf32, #tpu.memory_space<vmem>> -> memref<1x768xf32, #tpu.memory_space<vmem>>
      %94 = tpu.memref_slice %arg8[%c0_i32_61] : memref<2x!tpu.dma_semaphore, #tpu.memory_space<semaphore_mem>> -> memref<1x!tpu.dma_semaphore, #tpu.memory_space<semaphore_mem>>
      %95 = tpu.memref_squeeze %94 : memref<1x!tpu.dma_semaphore, #tpu.memory_space<semaphore_mem>> -> memref<!tpu.dma_semaphore, #tpu.memory_space<semaphore_mem>>
      tpu.enqueue_dma source(%91 : memref<1x768xf32, #tpu.memory_space<any>>) target(%93 : memref<1x768xf32, #tpu.memory_space<vmem>>) target_semaphore(%95 : memref<!tpu.dma_semaphore, #tpu.memory_space<semaphore_mem>>)
      %c8_i32_65 = arith.constant 8 : i32
      %96 = arith.muli %1, %c8_i32_65 : i32
      %c2_i32_66 = arith.constant 2 : i32
      %97 = arith.addi %96, %c2_i32_66 : i32
      %c2_i32_67 = arith.constant 2 : i32
      %98 = arith.cmpi slt, %97, %c2_i32_67 : i32
      %99 = arith.extui %98 : i1 to i32
      %c0_i32_68 = arith.constant 0 : i32
      %100 = arith.cmpi ne, %99, %c0_i32_68 : i32
      scf.if %100 {
        %c8_i32_89 = arith.constant 8 : i32
        %126 = arith.muli %1, %c8_i32_89 : i32
        %c2_i32_90 = arith.constant 2 : i32
        %127 = arith.addi %126, %c2_i32_90 : i32
        %128 = arith.index_cast %127 : i32 to index
        %129 = memref.load %arg2[%128] : memref<2xi32, #tpu.memory_space<smem>>
        %c1_i32_91 = arith.constant 1 : i32
        %130 = arith.cmpi sge, %129, %c1_i32_91 : i32
        %c1_i32_92 = arith.constant 1 : i32
        %131 = arith.subi %129, %c1_i32_92 : i32
        %c7_i32_93 = arith.constant 7 : i32
        %132 = arith.select %130, %131, %c7_i32_93 : i32
        %c0_i32_94 = arith.constant 0 : i32
        %c7_i32_95 = arith.constant 7 : i32
        %133 = arith.maxsi %c0_i32_94, %132 : i32
        %134 = arith.minsi %c7_i32_95, %133 : i32
        %c0_i32_96 = arith.constant 0 : i32
        %c0_i32_97 = arith.constant 0 : i32
        %c0_i32_98 = arith.constant 0 : i32
        %135 = tpu.memref_slice %arg3[%127, %134, %c0_i32_98] : memref<2x8x768xf32, #tpu.memory_space<any>> -> memref<1x1x768xf32, #tpu.memory_space<any>>
        %136 = tpu.memref_squeeze %135 : memref<1x1x768xf32, #tpu.memory_space<any>> -> memref<1x768xf32, #tpu.memory_space<any>>
        %c2_i32_99 = arith.constant 2 : i32
        %c0_i32_100 = arith.constant 0 : i32
        %137 = tpu.memref_slice %arg7[%c0_i32_96, %c2_i32_99, %c0_i32_100] : memref<2x8x768xf32, #tpu.memory_space<vmem>> -> memref<1x1x768xf32, #tpu.memory_space<vmem>>
        %138 = tpu.memref_squeeze %137 : memref<1x1x768xf32, #tpu.memory_space<vmem>> -> memref<1x768xf32, #tpu.memory_space<vmem>>
        %139 = tpu.memref_slice %arg8[%c0_i32_97] : memref<2x!tpu.dma_semaphore, #tpu.memory_space<semaphore_mem>> -> memref<1x!tpu.dma_semaphore, #tpu.memory_space<semaphore_mem>>
        %140 = tpu.memref_squeeze %139 : memref<1x!tpu.dma_semaphore, #tpu.memory_space<semaphore_mem>> -> memref<!tpu.dma_semaphore, #tpu.memory_space<semaphore_mem>>
        tpu.enqueue_dma source(%136 : memref<1x768xf32, #tpu.memory_space<any>>) target(%138 : memref<1x768xf32, #tpu.memory_space<vmem>>) target_semaphore(%140 : memref<!tpu.dma_semaphore, #tpu.memory_space<semaphore_mem>>)
      } else {
      }
      %c8_i32_69 = arith.constant 8 : i32
      %101 = arith.muli %1, %c8_i32_69 : i32
      %c3_i32_70 = arith.constant 3 : i32
      %102 = arith.addi %101, %c3_i32_70 : i32
      %c2_i32_71 = arith.constant 2 : i32
      %103 = arith.cmpi slt, %102, %c2_i32_71 : i32
      %104 = arith.extui %103 : i1 to i32
      %c0_i32_72 = arith.constant 0 : i32
      %105 = arith.cmpi ne, %104, %c0_i32_72 : i32
      scf.if %105 {
        %c8_i32_89 = arith.constant 8 : i32
        %126 = arith.muli %1, %c8_i32_89 : i32
        %c3_i32_90 = arith.constant 3 : i32
        %127 = arith.addi %126, %c3_i32_90 : i32
        %128 = arith.index_cast %127 : i32 to index
        %129 = memref.load %arg2[%128] : memref<2xi32, #tpu.memory_space<smem>>
        %c1_i32_91 = arith.constant 1 : i32
        %130 = arith.cmpi sge, %129, %c1_i32_91 : i32
        %c1_i32_92 = arith.constant 1 : i32
        %131 = arith.subi %129, %c1_i32_92 : i32
        %c7_i32_93 = arith.constant 7 : i32
        %132 = arith.select %130, %131, %c7_i32_93 : i32
        %c0_i32_94 = arith.constant 0 : i32
        %c7_i32_95 = arith.constant 7 : i32
        %133 = arith.maxsi %c0_i32_94, %132 : i32
        %134 = arith.minsi %c7_i32_95, %133 : i32
        %c0_i32_96 = arith.constant 0 : i32
        %c0_i32_97 = arith.constant 0 : i32
        %c0_i32_98 = arith.constant 0 : i32
        %135 = tpu.memref_slice %arg3[%127, %134, %c0_i32_98] : memref<2x8x768xf32, #tpu.memory_space<any>> -> memref<1x1x768xf32, #tpu.memory_space<any>>
        %136 = tpu.memref_squeeze %135 : memref<1x1x768xf32, #tpu.memory_space<any>> -> memref<1x768xf32, #tpu.memory_space<any>>
        %c3_i32_99 = arith.constant 3 : i32
        %c0_i32_100 = arith.constant 0 : i32
        %137 = tpu.memref_slice %arg7[%c0_i32_96, %c3_i32_99, %c0_i32_100] : memref<2x8x768xf32, #tpu.memory_space<vmem>> -> memref<1x1x768xf32, #tpu.memory_space<vmem>>
        %138 = tpu.memref_squeeze %137 : memref<1x1x768xf32, #tpu.memory_space<vmem>> -> memref<1x768xf32, #tpu.memory_space<vmem>>
        %139 = tpu.memref_slice %arg8[%c0_i32_97] : memref<2x!tpu.dma_semaphore, #tpu.memory_space<semaphore_mem>> -> memref<1x!tpu.dma_semaphore, #tpu.memory_space<semaphore_mem>>
        %140 = tpu.memref_squeeze %139 : memref<1x!tpu.dma_semaphore, #tpu.memory_space<semaphore_mem>> -> memref<!tpu.dma_semaphore, #tpu.memory_space<semaphore_mem>>
        tpu.enqueue_dma source(%136 : memref<1x768xf32, #tpu.memory_space<any>>) target(%138 : memref<1x768xf32, #tpu.memory_space<vmem>>) target_semaphore(%140 : memref<!tpu.dma_semaphore, #tpu.memory_space<semaphore_mem>>)
      } else {
      }
      %c8_i32_73 = arith.constant 8 : i32
      %106 = arith.muli %1, %c8_i32_73 : i32
      %c4_i32_74 = arith.constant 4 : i32
      %107 = arith.addi %106, %c4_i32_74 : i32
      %c2_i32_75 = arith.constant 2 : i32
      %108 = arith.cmpi slt, %107, %c2_i32_75 : i32
      %109 = arith.extui %108 : i1 to i32
      %c0_i32_76 = arith.constant 0 : i32
      %110 = arith.cmpi ne, %109, %c0_i32_76 : i32
      scf.if %110 {
        %c8_i32_89 = arith.constant 8 : i32
        %126 = arith.muli %1, %c8_i32_89 : i32
        %c4_i32_90 = arith.constant 4 : i32
        %127 = arith.addi %126, %c4_i32_90 : i32
        %128 = arith.index_cast %127 : i32 to index
        %129 = memref.load %arg2[%128] : memref<2xi32, #tpu.memory_space<smem>>
        %c1_i32_91 = arith.constant 1 : i32
        %130 = arith.cmpi sge, %129, %c1_i32_91 : i32
        %c1_i32_92 = arith.constant 1 : i32
        %131 = arith.subi %129, %c1_i32_92 : i32
        %c7_i32_93 = arith.constant 7 : i32
        %132 = arith.select %130, %131, %c7_i32_93 : i32
        %c0_i32_94 = arith.constant 0 : i32
        %c7_i32_95 = arith.constant 7 : i32
        %133 = arith.maxsi %c0_i32_94, %132 : i32
        %134 = arith.minsi %c7_i32_95, %133 : i32
        %c0_i32_96 = arith.constant 0 : i32
        %c0_i32_97 = arith.constant 0 : i32
        %c0_i32_98 = arith.constant 0 : i32
        %135 = tpu.memref_slice %arg3[%127, %134, %c0_i32_98] : memref<2x8x768xf32, #tpu.memory_space<any>> -> memref<1x1x768xf32, #tpu.memory_space<any>>
        %136 = tpu.memref_squeeze %135 : memref<1x1x768xf32, #tpu.memory_space<any>> -> memref<1x768xf32, #tpu.memory_space<any>>
        %c4_i32_99 = arith.constant 4 : i32
        %c0_i32_100 = arith.constant 0 : i32
        %137 = tpu.memref_slice %arg7[%c0_i32_96, %c4_i32_99, %c0_i32_100] : memref<2x8x768xf32, #tpu.memory_space<vmem>> -> memref<1x1x768xf32, #tpu.memory_space<vmem>>
        %138 = tpu.memref_squeeze %137 : memref<1x1x768xf32, #tpu.memory_space<vmem>> -> memref<1x768xf32, #tpu.memory_space<vmem>>
        %139 = tpu.memref_slice %arg8[%c0_i32_97] : memref<2x!tpu.dma_semaphore, #tpu.memory_space<semaphore_mem>> -> memref<1x!tpu.dma_semaphore, #tpu.memory_space<semaphore_mem>>
        %140 = tpu.memref_squeeze %139 : memref<1x!tpu.dma_semaphore, #tpu.memory_space<semaphore_mem>> -> memref<!tpu.dma_semaphore, #tpu.memory_space<semaphore_mem>>
        tpu.enqueue_dma source(%136 : memref<1x768xf32, #tpu.memory_space<any>>) target(%138 : memref<1x768xf32, #tpu.memory_space<vmem>>) target_semaphore(%140 : memref<!tpu.dma_semaphore, #tpu.memory_space<semaphore_mem>>)
      } else {
      }
      %c8_i32_77 = arith.constant 8 : i32
      %111 = arith.muli %1, %c8_i32_77 : i32
      %c5_i32_78 = arith.constant 5 : i32
      %112 = arith.addi %111, %c5_i32_78 : i32
      %c2_i32_79 = arith.constant 2 : i32
      %113 = arith.cmpi slt, %112, %c2_i32_79 : i32
      %114 = arith.extui %113 : i1 to i32
      %c0_i32_80 = arith.constant 0 : i32
      %115 = arith.cmpi ne, %114, %c0_i32_80 : i32
      scf.if %115 {
        %c8_i32_89 = arith.constant 8 : i32
        %126 = arith.muli %1, %c8_i32_89 : i32
        %c5_i32_90 = arith.constant 5 : i32
        %127 = arith.addi %126, %c5_i32_90 : i32
        %128 = arith.index_cast %127 : i32 to index
        %129 = memref.load %arg2[%128] : memref<2xi32, #tpu.memory_space<smem>>
        %c1_i32_91 = arith.constant 1 : i32
        %130 = arith.cmpi sge, %129, %c1_i32_91 : i32
        %c1_i32_92 = arith.constant 1 : i32
        %131 = arith.subi %129, %c1_i32_92 : i32
        %c7_i32_93 = arith.constant 7 : i32
        %132 = arith.select %130, %131, %c7_i32_93 : i32
        %c0_i32_94 = arith.constant 0 : i32
        %c7_i32_95 = arith.constant 7 : i32
        %133 = arith.maxsi %c0_i32_94, %132 : i32
        %134 = arith.minsi %c7_i32_95, %133 : i32
        %c0_i32_96 = arith.constant 0 : i32
        %c0_i32_97 = arith.constant 0 : i32
        %c0_i32_98 = arith.constant 0 : i32
        %135 = tpu.memref_slice %arg3[%127, %134, %c0_i32_98] : memref<2x8x768xf32, #tpu.memory_space<any>> -> memref<1x1x768xf32, #tpu.memory_space<any>>
        %136 = tpu.memref_squeeze %135 : memref<1x1x768xf32, #tpu.memory_space<any>> -> memref<1x768xf32, #tpu.memory_space<any>>
        %c5_i32_99 = arith.constant 5 : i32
        %c0_i32_100 = arith.constant 0 : i32
        %137 = tpu.memref_slice %arg7[%c0_i32_96, %c5_i32_99, %c0_i32_100] : memref<2x8x768xf32, #tpu.memory_space<vmem>> -> memref<1x1x768xf32, #tpu.memory_space<vmem>>
        %138 = tpu.memref_squeeze %137 : memref<1x1x768xf32, #tpu.memory_space<vmem>> -> memref<1x768xf32, #tpu.memory_space<vmem>>
        %139 = tpu.memref_slice %arg8[%c0_i32_97] : memref<2x!tpu.dma_semaphore, #tpu.memory_space<semaphore_mem>> -> memref<1x!tpu.dma_semaphore, #tpu.memory_space<semaphore_mem>>
        %140 = tpu.memref_squeeze %139 : memref<1x!tpu.dma_semaphore, #tpu.memory_space<semaphore_mem>> -> memref<!tpu.dma_semaphore, #tpu.memory_space<semaphore_mem>>
        tpu.enqueue_dma source(%136 : memref<1x768xf32, #tpu.memory_space<any>>) target(%138 : memref<1x768xf32, #tpu.memory_space<vmem>>) target_semaphore(%140 : memref<!tpu.dma_semaphore, #tpu.memory_space<semaphore_mem>>)
      } else {
      }
      %c8_i32_81 = arith.constant 8 : i32
      %116 = arith.muli %1, %c8_i32_81 : i32
      %c6_i32_82 = arith.constant 6 : i32
      %117 = arith.addi %116, %c6_i32_82 : i32
      %c2_i32_83 = arith.constant 2 : i32
      %118 = arith.cmpi slt, %117, %c2_i32_83 : i32
      %119 = arith.extui %118 : i1 to i32
      %c0_i32_84 = arith.constant 0 : i32
      %120 = arith.cmpi ne, %119, %c0_i32_84 : i32
      scf.if %120 {
        %c8_i32_89 = arith.constant 8 : i32
        %126 = arith.muli %1, %c8_i32_89 : i32
        %c6_i32_90 = arith.constant 6 : i32
        %127 = arith.addi %126, %c6_i32_90 : i32
        %128 = arith.index_cast %127 : i32 to index
        %129 = memref.load %arg2[%128] : memref<2xi32, #tpu.memory_space<smem>>
        %c1_i32_91 = arith.constant 1 : i32
        %130 = arith.cmpi sge, %129, %c1_i32_91 : i32
        %c1_i32_92 = arith.constant 1 : i32
        %131 = arith.subi %129, %c1_i32_92 : i32
        %c7_i32_93 = arith.constant 7 : i32
        %132 = arith.select %130, %131, %c7_i32_93 : i32
        %c0_i32_94 = arith.constant 0 : i32
        %c7_i32_95 = arith.constant 7 : i32
        %133 = arith.maxsi %c0_i32_94, %132 : i32
        %134 = arith.minsi %c7_i32_95, %133 : i32
        %c0_i32_96 = arith.constant 0 : i32
        %c0_i32_97 = arith.constant 0 : i32
        %c0_i32_98 = arith.constant 0 : i32
        %135 = tpu.memref_slice %arg3[%127, %134, %c0_i32_98] : memref<2x8x768xf32, #tpu.memory_space<any>> -> memref<1x1x768xf32, #tpu.memory_space<any>>
        %136 = tpu.memref_squeeze %135 : memref<1x1x768xf32, #tpu.memory_space<any>> -> memref<1x768xf32, #tpu.memory_space<any>>
        %c6_i32_99 = arith.constant 6 : i32
        %c0_i32_100 = arith.constant 0 : i32
        %137 = tpu.memref_slice %arg7[%c0_i32_96, %c6_i32_99, %c0_i32_100] : memref<2x8x768xf32, #tpu.memory_space<vmem>> -> memref<1x1x768xf32, #tpu.memory_space<vmem>>
        %138 = tpu.memref_squeeze %137 : memref<1x1x768xf32, #tpu.memory_space<vmem>> -> memref<1x768xf32, #tpu.memory_space<vmem>>
        %139 = tpu.memref_slice %arg8[%c0_i32_97] : memref<2x!tpu.dma_semaphore, #tpu.memory_space<semaphore_mem>> -> memref<1x!tpu.dma_semaphore, #tpu.memory_space<semaphore_mem>>
        %140 = tpu.memref_squeeze %139 : memref<1x!tpu.dma_semaphore, #tpu.memory_space<semaphore_mem>> -> memref<!tpu.dma_semaphore, #tpu.memory_space<semaphore_mem>>
        tpu.enqueue_dma source(%136 : memref<1x768xf32, #tpu.memory_space<any>>) target(%138 : memref<1x768xf32, #tpu.memory_space<vmem>>) target_semaphore(%140 : memref<!tpu.dma_semaphore, #tpu.memory_space<semaphore_mem>>)
      } else {
      }
      %c8_i32_85 = arith.constant 8 : i32
      %121 = arith.muli %1, %c8_i32_85 : i32
      %c7_i32_86 = arith.constant 7 : i32
      %122 = arith.addi %121, %c7_i32_86 : i32
      %c2_i32_87 = arith.constant 2 : i32
      %123 = arith.cmpi slt, %122, %c2_i32_87 : i32
      %124 = arith.extui %123 : i1 to i32
      %c0_i32_88 = arith.constant 0 : i32
      %125 = arith.cmpi ne, %124, %c0_i32_88 : i32
      scf.if %125 {
        %c8_i32_89 = arith.constant 8 : i32
        %126 = arith.muli %1, %c8_i32_89 : i32
        %c7_i32_90 = arith.constant 7 : i32
        %127 = arith.addi %126, %c7_i32_90 : i32
        %128 = arith.index_cast %127 : i32 to index
        %129 = memref.load %arg2[%128] : memref<2xi32, #tpu.memory_space<smem>>
        %c1_i32_91 = arith.constant 1 : i32
        %130 = arith.cmpi sge, %129, %c1_i32_91 : i32
        %c1_i32_92 = arith.constant 1 : i32
        %131 = arith.subi %129, %c1_i32_92 : i32
        %c7_i32_93 = arith.constant 7 : i32
        %132 = arith.select %130, %131, %c7_i32_93 : i32
        %c0_i32_94 = arith.constant 0 : i32
        %c7_i32_95 = arith.constant 7 : i32
        %133 = arith.maxsi %c0_i32_94, %132 : i32
        %134 = arith.minsi %c7_i32_95, %133 : i32
        %c0_i32_96 = arith.constant 0 : i32
        %c0_i32_97 = arith.constant 0 : i32
        %c0_i32_98 = arith.constant 0 : i32
        %135 = tpu.memref_slice %arg3[%127, %134, %c0_i32_98] : memref<2x8x768xf32, #tpu.memory_space<any>> -> memref<1x1x768xf32, #tpu.memory_space<any>>
        %136 = tpu.memref_squeeze %135 : memref<1x1x768xf32, #tpu.memory_space<any>> -> memref<1x768xf32, #tpu.memory_space<any>>
        %c7_i32_99 = arith.constant 7 : i32
        %c0_i32_100 = arith.constant 0 : i32
        %137 = tpu.memref_slice %arg7[%c0_i32_96, %c7_i32_99, %c0_i32_100] : memref<2x8x768xf32, #tpu.memory_space<vmem>> -> memref<1x1x768xf32, #tpu.memory_space<vmem>>
        %138 = tpu.memref_squeeze %137 : memref<1x1x768xf32, #tpu.memory_space<vmem>> -> memref<1x768xf32, #tpu.memory_space<vmem>>
        %139 = tpu.memref_slice %arg8[%c0_i32_97] : memref<2x!tpu.dma_semaphore, #tpu.memory_space<semaphore_mem>> -> memref<1x!tpu.dma_semaphore, #tpu.memory_space<semaphore_mem>>
        %140 = tpu.memref_squeeze %139 : memref<1x!tpu.dma_semaphore, #tpu.memory_space<semaphore_mem>> -> memref<!tpu.dma_semaphore, #tpu.memory_space<semaphore_mem>>
        tpu.enqueue_dma source(%136 : memref<1x768xf32, #tpu.memory_space<any>>) target(%138 : memref<1x768xf32, #tpu.memory_space<vmem>>) target_semaphore(%140 : memref<!tpu.dma_semaphore, #tpu.memory_space<semaphore_mem>>)
      } else {
      }
    } else {
    }
    %c0_i32_6 = arith.constant 0 : i32
    %c0_i32_7 = arith.constant 0 : i32
    %c0_i32_8 = arith.constant 0 : i32
    %15 = tpu.memref_slice %arg3[%c0_i32_6, %c0_i32_7, %c0_i32_8] : memref<2x8x768xf32, #tpu.memory_space<any>> -> memref<1x1x768xf32, #tpu.memory_space<any>>
    %16 = tpu.memref_squeeze %15 : memref<1x1x768xf32, #tpu.memory_space<any>> -> memref<1x768xf32, #tpu.memory_space<any>>
    %c0_i32_9 = arith.constant 0 : i32
    %c0_i32_10 = arith.constant 0 : i32
    %17 = tpu.memref_slice %arg7[%11, %c0_i32_9, %c0_i32_10] : memref<2x8x768xf32, #tpu.memory_space<vmem>> -> memref<1x1x768xf32, #tpu.memory_space<vmem>>
    %18 = tpu.memref_squeeze %17 : memref<1x1x768xf32, #tpu.memory_space<vmem>> -> memref<1x768xf32, #tpu.memory_space<vmem>>
    %19 = tpu.memref_slice %arg8[%11] : memref<2x!tpu.dma_semaphore, #tpu.memory_space<semaphore_mem>> -> memref<1x!tpu.dma_semaphore, #tpu.memory_space<semaphore_mem>>
    %20 = tpu.memref_squeeze %19 : memref<1x!tpu.dma_semaphore, #tpu.memory_space<semaphore_mem>> -> memref<!tpu.dma_semaphore, #tpu.memory_space<semaphore_mem>>
    tpu.wait_dma2 semaphore(%20 : memref<!tpu.dma_semaphore, #tpu.memory_space<semaphore_mem>>) src(%16 : memref<1x768xf32, #tpu.memory_space<any>>) dst(%18 : memref<1x768xf32, #tpu.memory_space<vmem>>)
    %c0_i32_11 = arith.constant 0 : i32
    %c0_i32_12 = arith.constant 0 : i32
    %c0_i32_13 = arith.constant 0 : i32
    %21 = tpu.memref_slice %arg3[%c0_i32_11, %c0_i32_12, %c0_i32_13] : memref<2x8x768xf32, #tpu.memory_space<any>> -> memref<1x1x768xf32, #tpu.memory_space<any>>
    %22 = tpu.memref_squeeze %21 : memref<1x1x768xf32, #tpu.memory_space<any>> -> memref<1x768xf32, #tpu.memory_space<any>>
    %c1_i32_14 = arith.constant 1 : i32
    %c0_i32_15 = arith.constant 0 : i32
    %23 = tpu.memref_slice %arg7[%11, %c1_i32_14, %c0_i32_15] : memref<2x8x768xf32, #tpu.memory_space<vmem>> -> memref<1x1x768xf32, #tpu.memory_space<vmem>>
    %24 = tpu.memref_squeeze %23 : memref<1x1x768xf32, #tpu.memory_space<vmem>> -> memref<1x768xf32, #tpu.memory_space<vmem>>
    %25 = tpu.memref_slice %arg8[%11] : memref<2x!tpu.dma_semaphore, #tpu.memory_space<semaphore_mem>> -> memref<1x!tpu.dma_semaphore, #tpu.memory_space<semaphore_mem>>
    %26 = tpu.memref_squeeze %25 : memref<1x!tpu.dma_semaphore, #tpu.memory_space<semaphore_mem>> -> memref<!tpu.dma_semaphore, #tpu.memory_space<semaphore_mem>>
    tpu.wait_dma2 semaphore(%26 : memref<!tpu.dma_semaphore, #tpu.memory_space<semaphore_mem>>) src(%22 : memref<1x768xf32, #tpu.memory_space<any>>) dst(%24 : memref<1x768xf32, #tpu.memory_space<vmem>>)
    %c8_i32 = arith.constant 8 : i32
    %27 = arith.muli %1, %c8_i32 : i32
    %c2_i32_16 = arith.constant 2 : i32
    %28 = arith.addi %27, %c2_i32_16 : i32
    %c2_i32_17 = arith.constant 2 : i32
    %29 = arith.cmpi slt, %28, %c2_i32_17 : i32
    %30 = arith.extui %29 : i1 to i32
    %c0_i32_18 = arith.constant 0 : i32
    %31 = arith.cmpi ne, %30, %c0_i32_18 : i32
    scf.if %31 {
      %c0_i32_41 = arith.constant 0 : i32
      %c0_i32_42 = arith.constant 0 : i32
      %c0_i32_43 = arith.constant 0 : i32
      %66 = tpu.memref_slice %arg3[%c0_i32_41, %c0_i32_42, %c0_i32_43] : memref<2x8x768xf32, #tpu.memory_space<any>> -> memref<1x1x768xf32, #tpu.memory_space<any>>
      %67 = tpu.memref_squeeze %66 : memref<1x1x768xf32, #tpu.memory_space<any>> -> memref<1x768xf32, #tpu.memory_space<any>>
      %c2_i32_44 = arith.constant 2 : i32
      %c0_i32_45 = arith.constant 0 : i32
      %68 = tpu.memref_slice %arg7[%11, %c2_i32_44, %c0_i32_45] : memref<2x8x768xf32, #tpu.memory_space<vmem>> -> memref<1x1x768xf32, #tpu.memory_space<vmem>>
      %69 = tpu.memref_squeeze %68 : memref<1x1x768xf32, #tpu.memory_space<vmem>> -> memref<1x768xf32, #tpu.memory_space<vmem>>
      %70 = tpu.memref_slice %arg8[%11] : memref<2x!tpu.dma_semaphore, #tpu.memory_space<semaphore_mem>> -> memref<1x!tpu.dma_semaphore, #tpu.memory_space<semaphore_mem>>
      %71 = tpu.memref_squeeze %70 : memref<1x!tpu.dma_semaphore, #tpu.memory_space<semaphore_mem>> -> memref<!tpu.dma_semaphore, #tpu.memory_space<semaphore_mem>>
      tpu.wait_dma2 semaphore(%71 : memref<!tpu.dma_semaphore, #tpu.memory_space<semaphore_mem>>) src(%67 : memref<1x768xf32, #tpu.memory_space<any>>) dst(%69 : memref<1x768xf32, #tpu.memory_space<vmem>>)
    } else {
    }
    %c8_i32_19 = arith.constant 8 : i32
    %32 = arith.muli %1, %c8_i32_19 : i32
    %c3_i32 = arith.constant 3 : i32
    %33 = arith.addi %32, %c3_i32 : i32
    %c2_i32_20 = arith.constant 2 : i32
    %34 = arith.cmpi slt, %33, %c2_i32_20 : i32
    %35 = arith.extui %34 : i1 to i32
    %c0_i32_21 = arith.constant 0 : i32
    %36 = arith.cmpi ne, %35, %c0_i32_21 : i32
    scf.if %36 {
      %c0_i32_41 = arith.constant 0 : i32
      %c0_i32_42 = arith.constant 0 : i32
      %c0_i32_43 = arith.constant 0 : i32
      %66 = tpu.memref_slice %arg3[%c0_i32_41, %c0_i32_42, %c0_i32_43] : memref<2x8x768xf32, #tpu.memory_space<any>> -> memref<1x1x768xf32, #tpu.memory_space<any>>
      %67 = tpu.memref_squeeze %66 : memref<1x1x768xf32, #tpu.memory_space<any>> -> memref<1x768xf32, #tpu.memory_space<any>>
      %c3_i32_44 = arith.constant 3 : i32
      %c0_i32_45 = arith.constant 0 : i32
      %68 = tpu.memref_slice %arg7[%11, %c3_i32_44, %c0_i32_45] : memref<2x8x768xf32, #tpu.memory_space<vmem>> -> memref<1x1x768xf32, #tpu.memory_space<vmem>>
      %69 = tpu.memref_squeeze %68 : memref<1x1x768xf32, #tpu.memory_space<vmem>> -> memref<1x768xf32, #tpu.memory_space<vmem>>
      %70 = tpu.memref_slice %arg8[%11] : memref<2x!tpu.dma_semaphore, #tpu.memory_space<semaphore_mem>> -> memref<1x!tpu.dma_semaphore, #tpu.memory_space<semaphore_mem>>
      %71 = tpu.memref_squeeze %70 : memref<1x!tpu.dma_semaphore, #tpu.memory_space<semaphore_mem>> -> memref<!tpu.dma_semaphore, #tpu.memory_space<semaphore_mem>>
      tpu.wait_dma2 semaphore(%71 : memref<!tpu.dma_semaphore, #tpu.memory_space<semaphore_mem>>) src(%67 : memref<1x768xf32, #tpu.memory_space<any>>) dst(%69 : memref<1x768xf32, #tpu.memory_space<vmem>>)
    } else {
    }
    %c8_i32_22 = arith.constant 8 : i32
    %37 = arith.muli %1, %c8_i32_22 : i32
    %c4_i32 = arith.constant 4 : i32
    %38 = arith.addi %37, %c4_i32 : i32
    %c2_i32_23 = arith.constant 2 : i32
    %39 = arith.cmpi slt, %38, %c2_i32_23 : i32
    %40 = arith.extui %39 : i1 to i32
    %c0_i32_24 = arith.constant 0 : i32
    %41 = arith.cmpi ne, %40, %c0_i32_24 : i32
    scf.if %41 {
      %c0_i32_41 = arith.constant 0 : i32
      %c0_i32_42 = arith.constant 0 : i32
      %c0_i32_43 = arith.constant 0 : i32
      %66 = tpu.memref_slice %arg3[%c0_i32_41, %c0_i32_42, %c0_i32_43] : memref<2x8x768xf32, #tpu.memory_space<any>> -> memref<1x1x768xf32, #tpu.memory_space<any>>
      %67 = tpu.memref_squeeze %66 : memref<1x1x768xf32, #tpu.memory_space<any>> -> memref<1x768xf32, #tpu.memory_space<any>>
      %c4_i32_44 = arith.constant 4 : i32
      %c0_i32_45 = arith.constant 0 : i32
      %68 = tpu.memref_slice %arg7[%11, %c4_i32_44, %c0_i32_45] : memref<2x8x768xf32, #tpu.memory_space<vmem>> -> memref<1x1x768xf32, #tpu.memory_space<vmem>>
      %69 = tpu.memref_squeeze %68 : memref<1x1x768xf32, #tpu.memory_space<vmem>> -> memref<1x768xf32, #tpu.memory_space<vmem>>
      %70 = tpu.memref_slice %arg8[%11] : memref<2x!tpu.dma_semaphore, #tpu.memory_space<semaphore_mem>> -> memref<1x!tpu.dma_semaphore, #tpu.memory_space<semaphore_mem>>
      %71 = tpu.memref_squeeze %70 : memref<1x!tpu.dma_semaphore, #tpu.memory_space<semaphore_mem>> -> memref<!tpu.dma_semaphore, #tpu.memory_space<semaphore_mem>>
      tpu.wait_dma2 semaphore(%71 : memref<!tpu.dma_semaphore, #tpu.memory_space<semaphore_mem>>) src(%67 : memref<1x768xf32, #tpu.memory_space<any>>) dst(%69 : memref<1x768xf32, #tpu.memory_space<vmem>>)
    } else {
    }
    %c8_i32_25 = arith.constant 8 : i32
    %42 = arith.muli %1, %c8_i32_25 : i32
    %c5_i32 = arith.constant 5 : i32
    %43 = arith.addi %42, %c5_i32 : i32
    %c2_i32_26 = arith.constant 2 : i32
    %44 = arith.cmpi slt, %43, %c2_i32_26 : i32
    %45 = arith.extui %44 : i1 to i32
    %c0_i32_27 = arith.constant 0 : i32
    %46 = arith.cmpi ne, %45, %c0_i32_27 : i32
    scf.if %46 {
      %c0_i32_41 = arith.constant 0 : i32
      %c0_i32_42 = arith.constant 0 : i32
      %c0_i32_43 = arith.constant 0 : i32
      %66 = tpu.memref_slice %arg3[%c0_i32_41, %c0_i32_42, %c0_i32_43] : memref<2x8x768xf32, #tpu.memory_space<any>> -> memref<1x1x768xf32, #tpu.memory_space<any>>
      %67 = tpu.memref_squeeze %66 : memref<1x1x768xf32, #tpu.memory_space<any>> -> memref<1x768xf32, #tpu.memory_space<any>>
      %c5_i32_44 = arith.constant 5 : i32
      %c0_i32_45 = arith.constant 0 : i32
      %68 = tpu.memref_slice %arg7[%11, %c5_i32_44, %c0_i32_45] : memref<2x8x768xf32, #tpu.memory_space<vmem>> -> memref<1x1x768xf32, #tpu.memory_space<vmem>>
      %69 = tpu.memref_squeeze %68 : memref<1x1x768xf32, #tpu.memory_space<vmem>> -> memref<1x768xf32, #tpu.memory_space<vmem>>
      %70 = tpu.memref_slice %arg8[%11] : memref<2x!tpu.dma_semaphore, #tpu.memory_space<semaphore_mem>> -> memref<1x!tpu.dma_semaphore, #tpu.memory_space<semaphore_mem>>
      %71 = tpu.memref_squeeze %70 : memref<1x!tpu.dma_semaphore, #tpu.memory_space<semaphore_mem>> -> memref<!tpu.dma_semaphore, #tpu.memory_space<semaphore_mem>>
      tpu.wait_dma2 semaphore(%71 : memref<!tpu.dma_semaphore, #tpu.memory_space<semaphore_mem>>) src(%67 : memref<1x768xf32, #tpu.memory_space<any>>) dst(%69 : memref<1x768xf32, #tpu.memory_space<vmem>>)
    } else {
    }
    %c8_i32_28 = arith.constant 8 : i32
    %47 = arith.muli %1, %c8_i32_28 : i32
    %c6_i32 = arith.constant 6 : i32
    %48 = arith.addi %47, %c6_i32 : i32
    %c2_i32_29 = arith.constant 2 : i32
    %49 = arith.cmpi slt, %48, %c2_i32_29 : i32
    %50 = arith.extui %49 : i1 to i32
    %c0_i32_30 = arith.constant 0 : i32
    %51 = arith.cmpi ne, %50, %c0_i32_30 : i32
    scf.if %51 {
      %c0_i32_41 = arith.constant 0 : i32
      %c0_i32_42 = arith.constant 0 : i32
      %c0_i32_43 = arith.constant 0 : i32
      %66 = tpu.memref_slice %arg3[%c0_i32_41, %c0_i32_42, %c0_i32_43] : memref<2x8x768xf32, #tpu.memory_space<any>> -> memref<1x1x768xf32, #tpu.memory_space<any>>
      %67 = tpu.memref_squeeze %66 : memref<1x1x768xf32, #tpu.memory_space<any>> -> memref<1x768xf32, #tpu.memory_space<any>>
      %c6_i32_44 = arith.constant 6 : i32
      %c0_i32_45 = arith.constant 0 : i32
      %68 = tpu.memref_slice %arg7[%11, %c6_i32_44, %c0_i32_45] : memref<2x8x768xf32, #tpu.memory_space<vmem>> -> memref<1x1x768xf32, #tpu.memory_space<vmem>>
      %69 = tpu.memref_squeeze %68 : memref<1x1x768xf32, #tpu.memory_space<vmem>> -> memref<1x768xf32, #tpu.memory_space<vmem>>
      %70 = tpu.memref_slice %arg8[%11] : memref<2x!tpu.dma_semaphore, #tpu.memory_space<semaphore_mem>> -> memref<1x!tpu.dma_semaphore, #tpu.memory_space<semaphore_mem>>
      %71 = tpu.memref_squeeze %70 : memref<1x!tpu.dma_semaphore, #tpu.memory_space<semaphore_mem>> -> memref<!tpu.dma_semaphore, #tpu.memory_space<semaphore_mem>>
      tpu.wait_dma2 semaphore(%71 : memref<!tpu.dma_semaphore, #tpu.memory_space<semaphore_mem>>) src(%67 : memref<1x768xf32, #tpu.memory_space<any>>) dst(%69 : memref<1x768xf32, #tpu.memory_space<vmem>>)
    } else {
    }
    %c8_i32_31 = arith.constant 8 : i32
    %52 = arith.muli %1, %c8_i32_31 : i32
    %c7_i32 = arith.constant 7 : i32
    %53 = arith.addi %52, %c7_i32 : i32
    %c2_i32_32 = arith.constant 2 : i32
    %54 = arith.cmpi slt, %53, %c2_i32_32 : i32
    %55 = arith.extui %54 : i1 to i32
    %c0_i32_33 = arith.constant 0 : i32
    %56 = arith.cmpi ne, %55, %c0_i32_33 : i32
    scf.if %56 {
      %c0_i32_41 = arith.constant 0 : i32
      %c0_i32_42 = arith.constant 0 : i32
      %c0_i32_43 = arith.constant 0 : i32
      %66 = tpu.memref_slice %arg3[%c0_i32_41, %c0_i32_42, %c0_i32_43] : memref<2x8x768xf32, #tpu.memory_space<any>> -> memref<1x1x768xf32, #tpu.memory_space<any>>
      %67 = tpu.memref_squeeze %66 : memref<1x1x768xf32, #tpu.memory_space<any>> -> memref<1x768xf32, #tpu.memory_space<any>>
      %c7_i32_44 = arith.constant 7 : i32
      %c0_i32_45 = arith.constant 0 : i32
      %68 = tpu.memref_slice %arg7[%11, %c7_i32_44, %c0_i32_45] : memref<2x8x768xf32, #tpu.memory_space<vmem>> -> memref<1x1x768xf32, #tpu.memory_space<vmem>>
      %69 = tpu.memref_squeeze %68 : memref<1x1x768xf32, #tpu.memory_space<vmem>> -> memref<1x768xf32, #tpu.memory_space<vmem>>
      %70 = tpu.memref_slice %arg8[%11] : memref<2x!tpu.dma_semaphore, #tpu.memory_space<semaphore_mem>> -> memref<1x!tpu.dma_semaphore, #tpu.memory_space<semaphore_mem>>
      %71 = tpu.memref_squeeze %70 : memref<1x!tpu.dma_semaphore, #tpu.memory_space<semaphore_mem>> -> memref<!tpu.dma_semaphore, #tpu.memory_space<semaphore_mem>>
      tpu.wait_dma2 semaphore(%71 : memref<!tpu.dma_semaphore, #tpu.memory_space<semaphore_mem>>) src(%67 : memref<1x768xf32, #tpu.memory_space<any>>) dst(%69 : memref<1x768xf32, #tpu.memory_space<vmem>>)
    } else {
    }
    %57 = arith.index_cast %11 : i32 to index
    %c0 = arith.constant 0 : index
    %c0_34 = arith.constant 0 : index
    %58 = vector.load %arg7[%57, %c0, %c0_34] : memref<2x8x768xf32, #tpu.memory_space<vmem>>, vector<1x8x768xf32>
    %59 = vector.shape_cast %58 : vector<1x8x768xf32> to vector<8x768xf32>
    %c0_35 = arith.constant 0 : index
    %c0_36 = arith.constant 0 : index
    %60 = vector.load %arg4[%c0_35, %c0_36] : memref<768x128xf32, #tpu.memory_space<vmem>>, vector<768x128xf32>
    %cst = arith.constant dense<0.000000e+00> : vector<8x128xf32>
    %61 = tpu.matmul %59, %60, %cst {dimension_numbers = #tpu.dot_dimension_numbers<[1], [0], [0], [1], [0, 0, 1, 1], [], []>} : vector<8x768xf32>, vector<768x128xf32>, vector<8x128xf32> -> vector<8x128xf32>
    %c0_37 = arith.constant 0 : index
    %c0_38 = arith.constant 0 : index
    %62 = vector.load %arg5[%c0_37, %c0_38] : memref<1x128xf32, #tpu.memory_space<vmem>>, vector<1x128xf32>
    %63 = vector.broadcast %62 : vector<1x128xf32> to vector<8x128xf32>
    %64 = arith.addf %61, %63 : vector<8x128xf32>
    %c0_39 = arith.constant 0 : index
    %c0_40 = arith.constant 0 : index
    %65 = vector.load %arg6[%c0_39, %c0_40] : memref<8x128xf32, #tpu.memory_space<vmem>>, vector<8x128xf32>
    tpu.vector_store %arg6[%c0_39, %c0_40], %64 {strides = array<i32>} : memref<8x128xf32, #tpu.memory_space<vmem>>, vector<8x128xf32>,
    return
  }
  func.func @transform_1(%arg0: i32, %arg1: i32, %arg2: memref<2xi32, #tpu.memory_space<smem>>) -> (i32, i32) {
    %c0_i32 = arith.constant 0 : i32
    %c0_i32_0 = arith.constant 0 : i32
    %c0_i32_1 = arith.constant 0 : i32
    return %c0_i32, %c0_i32_0 : i32, i32
  }
  func.func @transform_2(%arg0: i32, %arg1: i32, %arg2: memref<2xi32, #tpu.memory_space<smem>>) -> (i32, i32) {
    %c0_i32 = arith.constant 0 : i32
    %c0_i32_0 = arith.constant 0 : i32
    %c0_i32_1 = arith.constant 0 : i32
    return %c0_i32, %c0_i32_0 : i32, i32
  }
  func.func @transform_3(%arg0: i32, %arg1: i32, %arg2: memref<2xi32, #tpu.memory_space<smem>>) -> (i32, i32) {
    %c1_i32 = arith.constant 1 : i32
    %0 = arith.muli %arg0, %c1_i32 : i32
    %1 = arith.addi %0, %arg1 : i32
    %c0_i32 = arith.constant 0 : i32
    %c0_i32_0 = arith.constant 0 : i32
    return %1, %c0_i32 : i32, i32
  }
}

</mosaic_0001>

<llo_original>
// kernel: xlnet_mlp_head.1
$region0: #{xlnet_mlp_head.1}
  #allocation0 [shape = 'u32[]', space=smem, size = 0x4, offset = 0x4, fixed_abs, tag = 'smem constant byte address 0x4 - core index']
  #allocation1 [shape = 'u32[72,128]{1,0:T(1,128)}', space=vmem, size = 0x9000, scoped, tag = 'internal scratch']
  #allocation2 [shape = 'f32[2,8,768]{2,1,0:T(8,128)}', space=vmem, size = 0xc000, scoped, tag = 'scratch operand']
  #allocation3 [shape = 's32[2]{0}', space=sflag, size = 0x8, scoped, tag = 'scratch operand']
  #allocation4 [shape = 's32[1]{0}', space=sflag, size = 0x4, scoped, tag = 'scoped memory for xlnet_mlp_head.1']
  #allocation5 [shape = 'u8[512]{0}', space=smem, size = 0x200, scoped, tag = 'prefetched SMEM operand 0']
  #allocation6 [shape = 's32[]', space=sflag, size = 0x4, offset = 0, fixed_abs, tag = 'sflag constant byte address 0x0 - dummy sync flag']
  #allocation7 [shape = 's32[]', space=sflag, size = 0x4, offset = 0, fixed_abs, tag = 'sflag constant byte address 0x0 - dummy sync flag']
  #allocation8 [shape = 's32[]', space=sflag, size = 0x4, offset = 0, fixed_abs, tag = 'sflag constant byte address 0x0 - dummy sync flag']
  #allocation9 [shape = 's32[]', space=sflag, size = 0x4, offset = 0, fixed_abs, tag = 'sflag constant byte address 0x0 - dummy sync flag']
  #allocation10 [shape = 's32[]', space=sflag, size = 0x4, offset = 0, fixed_abs, tag = 'sflag constant byte address 0x0 - dummy sync flag']
  #allocation11 [shape = 's32[]', space=sflag, size = 0x4, offset = 0, fixed_abs, tag = 'sflag constant byte address 0x0 - dummy sync flag']
  #allocation12 [shape = 's32[]', space=sflag, size = 0x4, offset = 0, fixed_abs, tag = 'sflag constant byte address 0x0 - dummy sync flag']
  #allocation13 [shape = 's32[]', space=sflag, size = 0x4, offset = 0, fixed_abs, tag = 'sflag constant byte address 0x0 - dummy sync flag']
  %s0 = inlined_call_operand.vmem [shape: s32[2], index: 0, kind: input, shape index: {}]
  %s1 = inlined_call_operand.vmem [shape: f32[2,8,768], index: 1, kind: input, shape index: {}]
  %s2 = inlined_call_operand.vmem [shape: f32[768,128], index: 2, kind: input, shape index: {}]
  %s3 = inlined_call_operand.vmem [shape: f32[1,128], index: 3, kind: input, shape index: {}]
  %s4 = inlined_call_operand.vmem [shape: f32[8,128], index: 4, kind: output, shape index: {}]
  %s5 = sld [smem:[#allocation0]]
  $region310: #{xlnet_mlp_head.1} parent=0
    _
  %s7 = ssub.s32 1, %s5
  %s8 = scalar_select 0, %s7, %s5
  %s10 = sshll.u32 %s0, 4
  %s11 = int_to_ptr.vmem [resolvable:$true] %s10
  %13 = dma.vmem_to_smem %s11, 16, [#allocation5], [#allocation4]
  %15 = dma.done [#allocation4], 16
  %16 = sfence
  // Predicated region
  $region2: #{xlnet_mlp_head.1} parent=0 // pred_check
    _
  $region3: #{xlnet_mlp_head.1} parent=0 // pred_check_branch
    %18 = sbr.rel (0) target = $region5
  $region4: #{xlnet_mlp_head.1} parent=0 // pred_region
    _
  $region5: #{xlnet_mlp_head.1} parent=0 // pred_fallthru
    _
  // Predicated region
  $region6: #{xlnet_mlp_head.1} parent=0 // pred_check
    _
  $region7: #{xlnet_mlp_head.1} parent=0 // pred_check_branch
    %20 = sbr.rel (0) target = $region9
  $region8: #{xlnet_mlp_head.1} parent=0 // pred_region
    _
  $region9: #{xlnet_mlp_head.1} parent=0 // pred_fallthru
    _
  %s21 = sadd.s32 0, 0
  %p22 = scmp.lt.s32.totalorder %s21, 0
  %s23 = scalar_select %p22, %s21, 0
  %s24 = smul.addr %s23, 8
  %s25 = scalar_lea.vmem %s4, %s24
  %s26 = sadd.s32 0, 0
  %p27 = scmp.lt.s32.totalorder %s26, 0
  %s28 = scalar_select %p27, %s26, 0
  %s29 = smul.addr %s28, 8
  %s30 = scalar_lea.vmem %s4, %s29
  %s31 = sadd.s32 0, 0
  %s32 = sadd.s32 0, 0
  %s33 = ssub.s32 0, 0
  %s34 = ssub.s32 0, 0
  %p35 = scmp.ne.s32.totalorder 0, 0
  %p36 = scmp.lt.s32.totalorder 0, 0
  %p37 = pnand %p36, %p35
  %p38 = pneg %p37
  %s39 = sadd.s32 0, 2
  %s40 = scalar_select %p38, %s39, 0
  %p41 = scmp.eq.s32.totalorder 0, 0
  // Predicated region
  $region10: #{xlnet_mlp_head.1} parent=0 // pred_check
    %p42 = pneg %p41
  $region11: #{xlnet_mlp_head.1} parent=0 // pred_check_branch
    %44 = sbr.rel (%p42) target = $region13
  $region12: #{xlnet_mlp_head.1} parent=0 // pred_region
    %s45 = smul.u32 %s32, 8
    %s46 = sld [smem:[#allocation5 + %s45]]
    %p47 = scmp.ge.s32.totalorder %s46, 1
    %s48 = ssub.s32 %s46, 1
    %s49 = scalar_select %p47, %s48, 7
    %p50 = scmp.gt.s32.totalorder %s49, 0
    %s51 = scalar_select %p50, %s49, 0
    %p52 = scmp.lt.s32.totalorder %s51, 7
    %s53 = scalar_select %p52, %s51, 7
    %s54 = sshrl.u32 %s53, 3
    %s55 = sand.u32 %s53, 7
    %s56 = smul.u32 %s54, 48
    %s57 = sadd.s32 %s55, %s56
    %s58 = smul.u32 %s45, 48
    %s59 = sadd.s32 %s57, %s58
    %s60 = scalar_lea.vmem %s1, %s59
    // Predicated region
    $region14: #{xlnet_mlp_head.1} parent=12 // pred_check
      _
    $region15: #{xlnet_mlp_head.1} parent=12 // pred_check_branch
      %62 = sbr.rel target = $region17
    $region16: #{xlnet_mlp_head.1} parent=12 // pred_region
      // Predicated region
      $region29: #{xlnet_mlp_head.1} parent=16 // pred_check
        _
      $region30: #{xlnet_mlp_head.1} parent=16 // pred_check_branch
        %88 = sbr.rel (0) target = $region32
      $region31: #{xlnet_mlp_head.1} parent=16 // pred_region
        %s90 = ssub.s32 2, 1
        loop: start=0, step=1, limit=1
        $region33: #{xlnet_mlp_head.1} parent=31 // loop_pre_header
          _
        $region34: #{xlnet_mlp_head.1} parent=31 // loop_header
          %s92 = sphi 0, %s96
          %p93 = scmp.ge.s32.totalorder %s92, 1
          %s97 = sphi %s60, %s60
          %s98 = sphi [#allocation2], [#allocation2]
        $region35: #{xlnet_mlp_head.1} parent=31 // loop_header_branch
          %95 = sbr.rel (%p93) target = $region39
        $region36: #{xlnet_mlp_head.1} parent=31 // loop_body
          %v99 = vld [vmem:[%s97] sm:%s90]
          %100 = vst [vmem:[%s98] sm:%s90] %v99
          %v101 = vld [vmem:[%s97 + $0x8] sm:%s90]
          %102 = vst [vmem:[%s98 + $0x8] sm:%s90] %v101
          %v103 = vld [vmem:[%s97 + $0x10] sm:%s90]
          %104 = vst [vmem:[%s98 + $0x10] sm:%s90] %v103
          %v105 = vld [vmem:[%s97 + $0x18] sm:%s90]
          %106 = vst [vmem:[%s98 + $0x18] sm:%s90] %v105
          %v107 = vld [vmem:[%s97 + $0x20] sm:%s90]
          %108 = vst [vmem:[%s98 + $0x20] sm:%s90] %v107
          %v109 = vld [vmem:[%s97 + $0x28] sm:%s90]
          %110 = vst [vmem:[%s98 + $0x28] sm:%s90] %v109
        $region37: #{xlnet_mlp_head.1} parent=31 // loop_footer
          %s96 = sadd.s32 1, %s92
        $region38: #{xlnet_mlp_head.1} parent=31 // loop_footer_branch
          %91 = sbr.rel target = $region34
        $region39: #{xlnet_mlp_head.1} parent=31 // loop_exit
          _
      $region32: #{xlnet_mlp_head.1} parent=16 // pred_fallthru
        _
    $region17: #{xlnet_mlp_head.1} parent=12 // pred_fallthru
      _
    // Predicated region
    $region18: #{xlnet_mlp_head.1} parent=12 // pred_check
      _
    $region19: #{xlnet_mlp_head.1} parent=12 // pred_check_branch
      %64 = sbr.rel (0) target = $region21
    $region20: #{xlnet_mlp_head.1} parent=12 // pred_region
      %s66 = ssub.s32 2, 1
      loop: start=0, step=1, limit=1
      $region22: #{xlnet_mlp_head.1} parent=20 // loop_pre_header
        _
      $region23: #{xlnet_mlp_head.1} parent=20 // loop_header
        %s68 = sphi 0, %s72
        %p69 = scmp.ge.s32.totalorder %s68, 1
        %s73 = sphi %s60, %s60
        %s74 = sphi [#allocation2], [#allocation2]
      $region24: #{xlnet_mlp_head.1} parent=20 // loop_header_branch
        %71 = sbr.rel (%p69) target = $region28
      $region25: #{xlnet_mlp_head.1} parent=20 // loop_body
        %v75 = vld [vmem:[%s73] sm:%s66]
        %76 = vst [vmem:[%s74] sm:%s66] %v75
        %v77 = vld [vmem:[%s73 + $0x8] sm:%s66]
        %78 = vst [vmem:[%s74 + $0x8] sm:%s66] %v77
        %v79 = vld [vmem:[%s73 + $0x10] sm:%s66]
        %80 = vst [vmem:[%s74 + $0x10] sm:%s66] %v79
        %v81 = vld [vmem:[%s73 + $0x18] sm:%s66]
        %82 = vst [vmem:[%s74 + $0x18] sm:%s66] %v81
        %v83 = vld [vmem:[%s73 + $0x20] sm:%s66]
        %84 = vst [vmem:[%s74 + $0x20] sm:%s66] %v83
        %v85 = vld [vmem:[%s73 + $0x28] sm:%s66]
        %86 = vst [vmem:[%s74 + $0x28] sm:%s66] %v85
      $region26: #{xlnet_mlp_head.1} parent=20 // loop_footer
        %s72 = sadd.s32 1, %s68
      $region27: #{xlnet_mlp_head.1} parent=20 // loop_footer_branch
        %67 = sbr.rel target = $region23
      $region28: #{xlnet_mlp_head.1} parent=20 // loop_exit
        _
    $region21: #{xlnet_mlp_head.1} parent=12 // pred_fallthru
      _
    // Predicated region
    $region40: #{xlnet_mlp_head.1} parent=12 // pred_check
      _
    $region41: #{xlnet_mlp_head.1} parent=12 // pred_check_branch
      %113 = sbr.rel (0) target = $region43
    $region42: #{xlnet_mlp_head.1} parent=12 // pred_region
      %114 = vsyncadd [#allocation3], 96
    $region43: #{xlnet_mlp_head.1} parent=12 // pred_fallthru
      _
    %s115 = sadd.s32 %s45, 1
    %s116 = sld [smem:[#allocation5 + %s115]]
    %p117 = scmp.ge.s32.totalorder %s116, 1
    %s118 = ssub.s32 %s116, 1
    %s119 = scalar_select %p117, %s118, 7
    %p120 = scmp.gt.s32.totalorder %s119, 0
    %s121 = scalar_select %p120, %s119, 0
    %p122 = scmp.lt.s32.totalorder %s121, 7
    %s123 = scalar_select %p122, %s121, 7
    %s124 = sshrl.u32 %s123, 3
    %s125 = sand.u32 %s123, 7
    %s126 = smul.u32 %s124, 48
    %s127 = sadd.s32 %s125, %s126
    %s128 = smul.u32 %s115, 48
    %s129 = sadd.s32 %s127, %s128
    %s130 = scalar_lea.vmem %s1, %s129
    %s131 = scalar_lea.vmem [#allocation2], 1
    // Predicated region
    $region44: #{xlnet_mlp_head.1} parent=12 // pred_check
      _
    $region45: #{xlnet_mlp_head.1} parent=12 // pred_check_branch
      %133 = sbr.rel target = $region47
    $region46: #{xlnet_mlp_head.1} parent=12 // pred_region
      // Predicated region
      $region59: #{xlnet_mlp_head.1} parent=46 // pred_check
        _
      $region60: #{xlnet_mlp_head.1} parent=46 // pred_check_branch
        %159 = sbr.rel (0) target = $region62
      $region61: #{xlnet_mlp_head.1} parent=46 // pred_region
        %s161 = ssub.s32 2, 1
        loop: start=0, step=1, limit=1
        $region63: #{xlnet_mlp_head.1} parent=61 // loop_pre_header
          _
        $region64: #{xlnet_mlp_head.1} parent=61 // loop_header
          %s163 = sphi 0, %s167
          %p164 = scmp.ge.s32.totalorder %s163, 1
          %s168 = sphi %s130, %s130
          %s169 = sphi %s131, %s131
        $region65: #{xlnet_mlp_head.1} parent=61 // loop_header_branch
          %166 = sbr.rel (%p164) target = $region69
        $region66: #{xlnet_mlp_head.1} parent=61 // loop_body
          %v170 = vld [vmem:[%s168] sm:%s161]
          %171 = vst [vmem:[%s169] sm:%s161] %v170
          %v172 = vld [vmem:[%s168 + $0x8] sm:%s161]
          %173 = vst [vmem:[%s169 + $0x8] sm:%s161] %v172
          %v174 = vld [vmem:[%s168 + $0x10] sm:%s161]
          %175 = vst [vmem:[%s169 + $0x10] sm:%s161] %v174
          %v176 = vld [vmem:[%s168 + $0x18] sm:%s161]
          %177 = vst [vmem:[%s169 + $0x18] sm:%s161] %v176
          %v178 = vld [vmem:[%s168 + $0x20] sm:%s161]
          %179 = vst [vmem:[%s169 + $0x20] sm:%s161] %v178
          %v180 = vld [vmem:[%s168 + $0x28] sm:%s161]
          %181 = vst [vmem:[%s169 + $0x28] sm:%s161] %v180
        $region67: #{xlnet_mlp_head.1} parent=61 // loop_footer
          %s167 = sadd.s32 1, %s163
        $region68: #{xlnet_mlp_head.1} parent=61 // loop_footer_branch
          %162 = sbr.rel target = $region64
        $region69: #{xlnet_mlp_head.1} parent=61 // loop_exit
          _
      $region62: #{xlnet_mlp_head.1} parent=46 // pred_fallthru
        _
    $region47: #{xlnet_mlp_head.1} parent=12 // pred_fallthru
      _
    // Predicated region
    $region48: #{xlnet_mlp_head.1} parent=12 // pred_check
      _
    $region49: #{xlnet_mlp_head.1} parent=12 // pred_check_branch
      %135 = sbr.rel (0) target = $region51
    $region50: #{xlnet_mlp_head.1} parent=12 // pred_region
      %s137 = ssub.s32 2, 1
      loop: start=0, step=1, limit=1
      $region52: #{xlnet_mlp_head.1} parent=50 // loop_pre_header
        _
      $region53: #{xlnet_mlp_head.1} parent=50 // loop_header
        %s139 = sphi 0, %s143
        %p140 = scmp.ge.s32.totalorder %s139, 1
        %s144 = sphi %s130, %s130
        %s145 = sphi %s131, %s131
      $region54: #{xlnet_mlp_head.1} parent=50 // loop_header_branch
        %142 = sbr.rel (%p140) target = $region58
      $region55: #{xlnet_mlp_head.1} parent=50 // loop_body
        %v146 = vld [vmem:[%s144] sm:%s137]
        %147 = vst [vmem:[%s145] sm:%s137] %v146
        %v148 = vld [vmem:[%s144 + $0x8] sm:%s137]
        %149 = vst [vmem:[%s145 + $0x8] sm:%s137] %v148
        %v150 = vld [vmem:[%s144 + $0x10] sm:%s137]
        %151 = vst [vmem:[%s145 + $0x10] sm:%s137] %v150
        %v152 = vld [vmem:[%s144 + $0x18] sm:%s137]
        %153 = vst [vmem:[%s145 + $0x18] sm:%s137] %v152
        %v154 = vld [vmem:[%s144 + $0x20] sm:%s137]
        %155 = vst [vmem:[%s145 + $0x20] sm:%s137] %v154
        %v156 = vld [vmem:[%s144 + $0x28] sm:%s137]
        %157 = vst [vmem:[%s145 + $0x28] sm:%s137] %v156
      $region56: #{xlnet_mlp_head.1} parent=50 // loop_footer
        %s143 = sadd.s32 1, %s139
      $region57: #{xlnet_mlp_head.1} parent=50 // loop_footer_branch
        %138 = sbr.rel target = $region53
      $region58: #{xlnet_mlp_head.1} parent=50 // loop_exit
        _
    $region51: #{xlnet_mlp_head.1} parent=12 // pred_fallthru
      _
    // Predicated region
    $region70: #{xlnet_mlp_head.1} parent=12 // pred_check
      _
    $region71: #{xlnet_mlp_head.1} parent=12 // pred_check_branch
      %184 = sbr.rel (0) target = $region73
    $region72: #{xlnet_mlp_head.1} parent=12 // pred_region
      %185 = vsyncadd [#allocation3], 96
    $region73: #{xlnet_mlp_head.1} parent=12 // pred_fallthru
      _
    %s186 = sadd.s32 %s45, 2
    %p187 = scmp.lt.s32.totalorder %s186, 2
    // Predicated region
    $region74: #{xlnet_mlp_head.1} parent=12 // pred_check
      %p188 = pneg %p187
    $region75: #{xlnet_mlp_head.1} parent=12 // pred_check_branch
      %190 = sbr.rel (%p188) target = $region77
    $region76: #{xlnet_mlp_head.1} parent=12 // pred_region
      %s191 = sld [smem:[#allocation5 + %s186]]
      %p192 = scmp.ge.s32.totalorder %s191, 1
      %s193 = ssub.s32 %s191, 1
      %s194 = scalar_select %p192, %s193, 7
      %p195 = scmp.gt.s32.totalorder %s194, 0
      %s196 = scalar_select %p195, %s194, 0
      %p197 = scmp.lt.s32.totalorder %s196, 7
      %s198 = scalar_select %p197, %s196, 7
      %s199 = sshrl.u32 %s198, 3
      %s200 = sand.u32 %s198, 7
      %s201 = smul.u32 %s199, 48
      %s202 = sadd.s32 %s200, %s201
      %s203 = smul.u32 %s186, 48
      %s204 = sadd.s32 %s202, %s203
      %s205 = scalar_lea.vmem %s1, %s204
      %s206 = scalar_lea.vmem [#allocation2], 2
      // Predicated region
      $region78: #{xlnet_mlp_head.1} parent=76 // pred_check
        _
      $region79: #{xlnet_mlp_head.1} parent=76 // pred_check_branch
        %208 = sbr.rel target = $region81
      $region80: #{xlnet_mlp_head.1} parent=76 // pred_region
        // Predicated region
        $region93: #{xlnet_mlp_head.1} parent=80 // pred_check
          _
        $region94: #{xlnet_mlp_head.1} parent=80 // pred_check_branch
          %234 = sbr.rel (0) target = $region96
        $region95: #{xlnet_mlp_head.1} parent=80 // pred_region
          %s236 = ssub.s32 2, 1
          loop: start=0, step=1, limit=1
          $region97: #{xlnet_mlp_head.1} parent=95 // loop_pre_header
            _
          $region98: #{xlnet_mlp_head.1} parent=95 // loop_header
            %s238 = sphi 0, %s242
            %p239 = scmp.ge.s32.totalorder %s238, 1
            %s243 = sphi %s205, %s205
            %s244 = sphi %s206, %s206
          $region99: #{xlnet_mlp_head.1} parent=95 // loop_header_branch
            %241 = sbr.rel (%p239) target = $region103
          $region100: #{xlnet_mlp_head.1} parent=95 // loop_body
            %v245 = vld [vmem:[%s243] sm:%s236]
            %246 = vst [vmem:[%s244] sm:%s236] %v245
            %v247 = vld [vmem:[%s243 + $0x8] sm:%s236]
            %248 = vst [vmem:[%s244 + $0x8] sm:%s236] %v247
            %v249 = vld [vmem:[%s243 + $0x10] sm:%s236]
            %250 = vst [vmem:[%s244 + $0x10] sm:%s236] %v249
            %v251 = vld [vmem:[%s243 + $0x18] sm:%s236]
            %252 = vst [vmem:[%s244 + $0x18] sm:%s236] %v251
            %v253 = vld [vmem:[%s243 + $0x20] sm:%s236]
            %254 = vst [vmem:[%s244 + $0x20] sm:%s236] %v253
            %v255 = vld [vmem:[%s243 + $0x28] sm:%s236]
            %256 = vst [vmem:[%s244 + $0x28] sm:%s236] %v255
          $region101: #{xlnet_mlp_head.1} parent=95 // loop_footer
            %s242 = sadd.s32 1, %s238
          $region102: #{xlnet_mlp_head.1} parent=95 // loop_footer_branch
            %237 = sbr.rel target = $region98
          $region103: #{xlnet_mlp_head.1} parent=95 // loop_exit
            _
        $region96: #{xlnet_mlp_head.1} parent=80 // pred_fallthru
          _
      $region81: #{xlnet_mlp_head.1} parent=76 // pred_fallthru
        _
      // Predicated region
      $region82: #{xlnet_mlp_head.1} parent=76 // pred_check
        _
      $region83: #{xlnet_mlp_head.1} parent=76 // pred_check_branch
        %210 = sbr.rel (0) target = $region85
      $region84: #{xlnet_mlp_head.1} parent=76 // pred_region
        %s212 = ssub.s32 2, 1
        loop: start=0, step=1, limit=1
        $region86: #{xlnet_mlp_head.1} parent=84 // loop_pre_header
          _
        $region87: #{xlnet_mlp_head.1} parent=84 // loop_header
          %s214 = sphi 0, %s218
          %p215 = scmp.ge.s32.totalorder %s214, 1
          %s219 = sphi %s205, %s205
          %s220 = sphi %s206, %s206
        $region88: #{xlnet_mlp_head.1} parent=84 // loop_header_branch
          %217 = sbr.rel (%p215) target = $region92
        $region89: #{xlnet_mlp_head.1} parent=84 // loop_body
          %v221 = vld [vmem:[%s219] sm:%s212]
          %222 = vst [vmem:[%s220] sm:%s212] %v221
          %v223 = vld [vmem:[%s219 + $0x8] sm:%s212]
          %224 = vst [vmem:[%s220 + $0x8] sm:%s212] %v223
          %v225 = vld [vmem:[%s219 + $0x10] sm:%s212]
          %226 = vst [vmem:[%s220 + $0x10] sm:%s212] %v225
          %v227 = vld [vmem:[%s219 + $0x18] sm:%s212]
          %228 = vst [vmem:[%s220 + $0x18] sm:%s212] %v227
          %v229 = vld [vmem:[%s219 + $0x20] sm:%s212]
          %230 = vst [vmem:[%s220 + $0x20] sm:%s212] %v229
          %v231 = vld [vmem:[%s219 + $0x28] sm:%s212]
          %232 = vst [vmem:[%s220 + $0x28] sm:%s212] %v231
        $region90: #{xlnet_mlp_head.1} parent=84 // loop_footer
          %s218 = sadd.s32 1, %s214
        $region91: #{xlnet_mlp_head.1} parent=84 // loop_footer_branch
          %213 = sbr.rel target = $region87
        $region92: #{xlnet_mlp_head.1} parent=84 // loop_exit
          _
      $region85: #{xlnet_mlp_head.1} parent=76 // pred_fallthru
        _
      // Predicated region
      $region104: #{xlnet_mlp_head.1} parent=76 // pred_check
        _
      $region105: #{xlnet_mlp_head.1} parent=76 // pred_check_branch
        %259 = sbr.rel (0) target = $region107
      $region106: #{xlnet_mlp_head.1} parent=76 // pred_region
        %260 = vsyncadd [#allocation3], 96
      $region107: #{xlnet_mlp_head.1} parent=76 // pred_fallthru
        _
    $region77: #{xlnet_mlp_head.1} parent=12 // pred_fallthru
      _
    %s261 = sadd.s32 %s45, 3
    %p262 = scmp.lt.s32.totalorder %s261, 2
    // Predicated region
    $region108: #{xlnet_mlp_head.1} parent=12 // pred_check
      %p263 = pneg %p262
    $region109: #{xlnet_mlp_head.1} parent=12 // pred_check_branch
      %265 = sbr.rel (%p263) target = $region111
    $region110: #{xlnet_mlp_head.1} parent=12 // pred_region
      %s266 = sld [smem:[#allocation5 + %s261]]
      %p267 = scmp.ge.s32.totalorder %s266, 1
      %s268 = ssub.s32 %s266, 1
      %s269 = scalar_select %p267, %s268, 7
      %p270 = scmp.gt.s32.totalorder %s269, 0
      %s271 = scalar_select %p270, %s269, 0
      %p272 = scmp.lt.s32.totalorder %s271, 7
      %s273 = scalar_select %p272, %s271, 7
      %s274 = sshrl.u32 %s273, 3
      %s275 = sand.u32 %s273, 7
      %s276 = smul.u32 %s274, 48
      %s277 = sadd.s32 %s275, %s276
      %s278 = smul.u32 %s261, 48
      %s279 = sadd.s32 %s277, %s278
      %s280 = scalar_lea.vmem %s1, %s279
      %s281 = scalar_lea.vmem [#allocation2], 3
      // Predicated region
      $region112: #{xlnet_mlp_head.1} parent=110 // pred_check
        _
      $region113: #{xlnet_mlp_head.1} parent=110 // pred_check_branch
        %283 = sbr.rel target = $region115
      $region114: #{xlnet_mlp_head.1} parent=110 // pred_region
        // Predicated region
        $region127: #{xlnet_mlp_head.1} parent=114 // pred_check
          _
        $region128: #{xlnet_mlp_head.1} parent=114 // pred_check_branch
          %309 = sbr.rel (0) target = $region130
        $region129: #{xlnet_mlp_head.1} parent=114 // pred_region
          %s311 = ssub.s32 2, 1
          loop: start=0, step=1, limit=1
          $region131: #{xlnet_mlp_head.1} parent=129 // loop_pre_header
            _
          $region132: #{xlnet_mlp_head.1} parent=129 // loop_header
            %s313 = sphi 0, %s317
            %p314 = scmp.ge.s32.totalorder %s313, 1
            %s318 = sphi %s280, %s280
            %s319 = sphi %s281, %s281
          $region133: #{xlnet_mlp_head.1} parent=129 // loop_header_branch
            %316 = sbr.rel (%p314) target = $region137
          $region134: #{xlnet_mlp_head.1} parent=129 // loop_body
            %v320 = vld [vmem:[%s318] sm:%s311]
            %321 = vst [vmem:[%s319] sm:%s311] %v320
            %v322 = vld [vmem:[%s318 + $0x8] sm:%s311]
            %323 = vst [vmem:[%s319 + $0x8] sm:%s311] %v322
            %v324 = vld [vmem:[%s318 + $0x10] sm:%s311]
            %325 = vst [vmem:[%s319 + $0x10] sm:%s311] %v324
            %v326 = vld [vmem:[%s318 + $0x18] sm:%s311]
            %327 = vst [vmem:[%s319 + $0x18] sm:%s311] %v326
            %v328 = vld [vmem:[%s318 + $0x20] sm:%s311]
            %329 = vst [vmem:[%s319 + $0x20] sm:%s311] %v328
            %v330 = vld [vmem:[%s318 + $0x28] sm:%s311]
            %331 = vst [vmem:[%s319 + $0x28] sm:%s311] %v330
          $region135: #{xlnet_mlp_head.1} parent=129 // loop_footer
            %s317 = sadd.s32 1, %s313
          $region136: #{xlnet_mlp_head.1} parent=129 // loop_footer_branch
            %312 = sbr.rel target = $region132
          $region137: #{xlnet_mlp_head.1} parent=129 // loop_exit
            _
        $region130: #{xlnet_mlp_head.1} parent=114 // pred_fallthru
          _
      $region115: #{xlnet_mlp_head.1} parent=110 // pred_fallthru
        _
      // Predicated region
      $region116: #{xlnet_mlp_head.1} parent=110 // pred_check
        _
      $region117: #{xlnet_mlp_head.1} parent=110 // pred_check_branch
        %285 = sbr.rel (0) target = $region119
      $region118: #{xlnet_mlp_head.1} parent=110 // pred_region
        %s287 = ssub.s32 2, 1
        loop: start=0, step=1, limit=1
        $region120: #{xlnet_mlp_head.1} parent=118 // loop_pre_header
          _
        $region121: #{xlnet_mlp_head.1} parent=118 // loop_header
          %s289 = sphi 0, %s293
          %p290 = scmp.ge.s32.totalorder %s289, 1
          %s294 = sphi %s280, %s280
          %s295 = sphi %s281, %s281
        $region122: #{xlnet_mlp_head.1} parent=118 // loop_header_branch
          %292 = sbr.rel (%p290) target = $region126
        $region123: #{xlnet_mlp_head.1} parent=118 // loop_body
          %v296 = vld [vmem:[%s294] sm:%s287]
          %297 = vst [vmem:[%s295] sm:%s287] %v296
          %v298 = vld [vmem:[%s294 + $0x8] sm:%s287]
          %299 = vst [vmem:[%s295 + $0x8] sm:%s287] %v298
          %v300 = vld [vmem:[%s294 + $0x10] sm:%s287]
          %301 = vst [vmem:[%s295 + $0x10] sm:%s287] %v300
          %v302 = vld [vmem:[%s294 + $0x18] sm:%s287]
          %303 = vst [vmem:[%s295 + $0x18] sm:%s287] %v302
          %v304 = vld [vmem:[%s294 + $0x20] sm:%s287]
          %305 = vst [vmem:[%s295 + $0x20] sm:%s287] %v304
          %v306 = vld [vmem:[%s294 + $0x28] sm:%s287]
          %307 = vst [vmem:[%s295 + $0x28] sm:%s287] %v306
        $region124: #{xlnet_mlp_head.1} parent=118 // loop_footer
          %s293 = sadd.s32 1, %s289
        $region125: #{xlnet_mlp_head.1} parent=118 // loop_footer_branch
          %288 = sbr.rel target = $region121
        $region126: #{xlnet_mlp_head.1} parent=118 // loop_exit
          _
      $region119: #{xlnet_mlp_head.1} parent=110 // pred_fallthru
        _
      // Predicated region
      $region138: #{xlnet_mlp_head.1} parent=110 // pred_check
        _
      $region139: #{xlnet_mlp_head.1} parent=110 // pred_check_branch
        %334 = sbr.rel (0) target = $region141
      $region140: #{xlnet_mlp_head.1} parent=110 // pred_region
        %335 = vsyncadd [#allocation3], 96
      $region141: #{xlnet_mlp_head.1} parent=110 // pred_fallthru
        _
    $region111: #{xlnet_mlp_head.1} parent=12 // pred_fallthru
      _
    %s336 = sadd.s32 %s45, 4
    %p337 = scmp.lt.s32.totalorder %s336, 2
    // Predicated region
    $region142: #{xlnet_mlp_head.1} parent=12 // pred_check
      %p338 = pneg %p337
    $region143: #{xlnet_mlp_head.1} parent=12 // pred_check_branch
      %340 = sbr.rel (%p338) target = $region145
    $region144: #{xlnet_mlp_head.1} parent=12 // pred_region
      %s341 = sld [smem:[#allocation5 + %s336]]
      %p342 = scmp.ge.s32.totalorder %s341, 1
      %s343 = ssub.s32 %s341, 1
      %s344 = scalar_select %p342, %s343, 7
      %p345 = scmp.gt.s32.totalorder %s344, 0
      %s346 = scalar_select %p345, %s344, 0
      %p347 = scmp.lt.s32.totalorder %s346, 7
      %s348 = scalar_select %p347, %s346, 7
      %s349 = sshrl.u32 %s348, 3
      %s350 = sand.u32 %s348, 7
      %s351 = smul.u32 %s349, 48
      %s352 = sadd.s32 %s350, %s351
      %s353 = smul.u32 %s336, 48
      %s354 = sadd.s32 %s352, %s353
      %s355 = scalar_lea.vmem %s1, %s354
      %s356 = scalar_lea.vmem [#allocation2], 4
      // Predicated region
      $region146: #{xlnet_mlp_head.1} parent=144 // pred_check
        _
      $region147: #{xlnet_mlp_head.1} parent=144 // pred_check_branch
        %358 = sbr.rel target = $region149
      $region148: #{xlnet_mlp_head.1} parent=144 // pred_region
        // Predicated region
        $region161: #{xlnet_mlp_head.1} parent=148 // pred_check
          _
        $region162: #{xlnet_mlp_head.1} parent=148 // pred_check_branch
          %384 = sbr.rel (0) target = $region164
        $region163: #{xlnet_mlp_head.1} parent=148 // pred_region
          %s386 = ssub.s32 2, 1
          loop: start=0, step=1, limit=1
          $region165: #{xlnet_mlp_head.1} parent=163 // loop_pre_header
            _
          $region166: #{xlnet_mlp_head.1} parent=163 // loop_header
            %s388 = sphi 0, %s392
            %p389 = scmp.ge.s32.totalorder %s388, 1
            %s393 = sphi %s355, %s355
            %s394 = sphi %s356, %s356
          $region167: #{xlnet_mlp_head.1} parent=163 // loop_header_branch
            %391 = sbr.rel (%p389) target = $region171
          $region168: #{xlnet_mlp_head.1} parent=163 // loop_body
            %v395 = vld [vmem:[%s393] sm:%s386]
            %396 = vst [vmem:[%s394] sm:%s386] %v395
            %v397 = vld [vmem:[%s393 + $0x8] sm:%s386]
            %398 = vst [vmem:[%s394 + $0x8] sm:%s386] %v397
            %v399 = vld [vmem:[%s393 + $0x10] sm:%s386]
            %400 = vst [vmem:[%s394 + $0x10] sm:%s386] %v399
            %v401 = vld [vmem:[%s393 + $0x18] sm:%s386]
            %402 = vst [vmem:[%s394 + $0x18] sm:%s386] %v401
            %v403 = vld [vmem:[%s393 + $0x20] sm:%s386]
            %404 = vst [vmem:[%s394 + $0x20] sm:%s386] %v403
            %v405 = vld [vmem:[%s393 + $0x28] sm:%s386]
            %406 = vst [vmem:[%s394 + $0x28] sm:%s386] %v405
          $region169: #{xlnet_mlp_head.1} parent=163 // loop_footer
            %s392 = sadd.s32 1, %s388
          $region170: #{xlnet_mlp_head.1} parent=163 // loop_footer_branch
            %387 = sbr.rel target = $region166
          $region171: #{xlnet_mlp_head.1} parent=163 // loop_exit
            _
        $region164: #{xlnet_mlp_head.1} parent=148 // pred_fallthru
          _
      $region149: #{xlnet_mlp_head.1} parent=144 // pred_fallthru
        _
      // Predicated region
      $region150: #{xlnet_mlp_head.1} parent=144 // pred_check
        _
      $region151: #{xlnet_mlp_head.1} parent=144 // pred_check_branch
        %360 = sbr.rel (0) target = $region153
      $region152: #{xlnet_mlp_head.1} parent=144 // pred_region
        %s362 = ssub.s32 2, 1
        loop: start=0, step=1, limit=1
        $region154: #{xlnet_mlp_head.1} parent=152 // loop_pre_header
          _
        $region155: #{xlnet_mlp_head.1} parent=152 // loop_header
          %s364 = sphi 0, %s368
          %p365 = scmp.ge.s32.totalorder %s364, 1
          %s369 = sphi %s355, %s355
          %s370 = sphi %s356, %s356
        $region156: #{xlnet_mlp_head.1} parent=152 // loop_header_branch
          %367 = sbr.rel (%p365) target = $region160
        $region157: #{xlnet_mlp_head.1} parent=152 // loop_body
          %v371 = vld [vmem:[%s369] sm:%s362]
          %372 = vst [vmem:[%s370] sm:%s362] %v371
          %v373 = vld [vmem:[%s369 + $0x8] sm:%s362]
          %374 = vst [vmem:[%s370 + $0x8] sm:%s362] %v373
          %v375 = vld [vmem:[%s369 + $0x10] sm:%s362]
          %376 = vst [vmem:[%s370 + $0x10] sm:%s362] %v375
          %v377 = vld [vmem:[%s369 + $0x18] sm:%s362]
          %378 = vst [vmem:[%s370 + $0x18] sm:%s362] %v377
          %v379 = vld [vmem:[%s369 + $0x20] sm:%s362]
          %380 = vst [vmem:[%s370 + $0x20] sm:%s362] %v379
          %v381 = vld [vmem:[%s369 + $0x28] sm:%s362]
          %382 = vst [vmem:[%s370 + $0x28] sm:%s362] %v381
        $region158: #{xlnet_mlp_head.1} parent=152 // loop_footer
          %s368 = sadd.s32 1, %s364
        $region159: #{xlnet_mlp_head.1} parent=152 // loop_footer_branch
          %363 = sbr.rel target = $region155
        $region160: #{xlnet_mlp_head.1} parent=152 // loop_exit
          _
      $region153: #{xlnet_mlp_head.1} parent=144 // pred_fallthru
        _
      // Predicated region
      $region172: #{xlnet_mlp_head.1} parent=144 // pred_check
        _
      $region173: #{xlnet_mlp_head.1} parent=144 // pred_check_branch
        %409 = sbr.rel (0) target = $region175
      $region174: #{xlnet_mlp_head.1} parent=144 // pred_region
        %410 = vsyncadd [#allocation3], 96
      $region175: #{xlnet_mlp_head.1} parent=144 // pred_fallthru
        _
    $region145: #{xlnet_mlp_head.1} parent=12 // pred_fallthru
      _
    %s411 = sadd.s32 %s45, 5
    %p412 = scmp.lt.s32.totalorder %s411, 2
    // Predicated region
    $region176: #{xlnet_mlp_head.1} parent=12 // pred_check
      %p413 = pneg %p412
    $region177: #{xlnet_mlp_head.1} parent=12 // pred_check_branch
      %415 = sbr.rel (%p413) target = $region179
    $region178: #{xlnet_mlp_head.1} parent=12 // pred_region
      %s416 = sld [smem:[#allocation5 + %s411]]
      %p417 = scmp.ge.s32.totalorder %s416, 1
      %s418 = ssub.s32 %s416, 1
      %s419 = scalar_select %p417, %s418, 7
      %p420 = scmp.gt.s32.totalorder %s419, 0
      %s421 = scalar_select %p420, %s419, 0
      %p422 = scmp.lt.s32.totalorder %s421, 7
      %s423 = scalar_select %p422, %s421, 7
      %s424 = sshrl.u32 %s423, 3
      %s425 = sand.u32 %s423, 7
      %s426 = smul.u32 %s424, 48
      %s427 = sadd.s32 %s425, %s426
      %s428 = smul.u32 %s411, 48
      %s429 = sadd.s32 %s427, %s428
      %s430 = scalar_lea.vmem %s1, %s429
      %s431 = scalar_lea.vmem [#allocation2], 5
      // Predicated region
      $region180: #{xlnet_mlp_head.1} parent=178 // pred_check
        _
      $region181: #{xlnet_mlp_head.1} parent=178 // pred_check_branch
        %433 = sbr.rel target = $region183
      $region182: #{xlnet_mlp_head.1} parent=178 // pred_region
        // Predicated region
        $region195: #{xlnet_mlp_head.1} parent=182 // pred_check
          _
        $region196: #{xlnet_mlp_head.1} parent=182 // pred_check_branch
          %459 = sbr.rel (0) target = $region198
        $region197: #{xlnet_mlp_head.1} parent=182 // pred_region
          %s461 = ssub.s32 2, 1
          loop: start=0, step=1, limit=1
          $region199: #{xlnet_mlp_head.1} parent=197 // loop_pre_header
            _
          $region200: #{xlnet_mlp_head.1} parent=197 // loop_header
            %s463 = sphi 0, %s467
            %p464 = scmp.ge.s32.totalorder %s463, 1
            %s468 = sphi %s430, %s430
            %s469 = sphi %s431, %s431
          $region201: #{xlnet_mlp_head.1} parent=197 // loop_header_branch
            %466 = sbr.rel (%p464) target = $region205
          $region202: #{xlnet_mlp_head.1} parent=197 // loop_body
            %v470 = vld [vmem:[%s468] sm:%s461]
            %471 = vst [vmem:[%s469] sm:%s461] %v470
            %v472 = vld [vmem:[%s468 + $0x8] sm:%s461]
            %473 = vst [vmem:[%s469 + $0x8] sm:%s461] %v472
            %v474 = vld [vmem:[%s468 + $0x10] sm:%s461]
            %475 = vst [vmem:[%s469 + $0x10] sm:%s461] %v474
            %v476 = vld [vmem:[%s468 + $0x18] sm:%s461]
            %477 = vst [vmem:[%s469 + $0x18] sm:%s461] %v476
            %v478 = vld [vmem:[%s468 + $0x20] sm:%s461]
            %479 = vst [vmem:[%s469 + $0x20] sm:%s461] %v478
            %v480 = vld [vmem:[%s468 + $0x28] sm:%s461]
            %481 = vst [vmem:[%s469 + $0x28] sm:%s461] %v480
          $region203: #{xlnet_mlp_head.1} parent=197 // loop_footer
            %s467 = sadd.s32 1, %s463
          $region204: #{xlnet_mlp_head.1} parent=197 // loop_footer_branch
            %462 = sbr.rel target = $region200
          $region205: #{xlnet_mlp_head.1} parent=197 // loop_exit
            _
        $region198: #{xlnet_mlp_head.1} parent=182 // pred_fallthru
          _
      $region183: #{xlnet_mlp_head.1} parent=178 // pred_fallthru
        _
      // Predicated region
      $region184: #{xlnet_mlp_head.1} parent=178 // pred_check
        _
      $region185: #{xlnet_mlp_head.1} parent=178 // pred_check_branch
        %435 = sbr.rel (0) target = $region187
      $region186: #{xlnet_mlp_head.1} parent=178 // pred_region
        %s437 = ssub.s32 2, 1
        loop: start=0, step=1, limit=1
        $region188: #{xlnet_mlp_head.1} parent=186 // loop_pre_header
          _
        $region189: #{xlnet_mlp_head.1} parent=186 // loop_header
          %s439 = sphi 0, %s443
          %p440 = scmp.ge.s32.totalorder %s439, 1
          %s444 = sphi %s430, %s430
          %s445 = sphi %s431, %s431
        $region190: #{xlnet_mlp_head.1} parent=186 // loop_header_branch
          %442 = sbr.rel (%p440) target = $region194
        $region191: #{xlnet_mlp_head.1} parent=186 // loop_body
          %v446 = vld [vmem:[%s444] sm:%s437]
          %447 = vst [vmem:[%s445] sm:%s437] %v446
          %v448 = vld [vmem:[%s444 + $0x8] sm:%s437]
          %449 = vst [vmem:[%s445 + $0x8] sm:%s437] %v448
          %v450 = vld [vmem:[%s444 + $0x10] sm:%s437]
          %451 = vst [vmem:[%s445 + $0x10] sm:%s437] %v450
          %v452 = vld [vmem:[%s444 + $0x18] sm:%s437]
          %453 = vst [vmem:[%s445 + $0x18] sm:%s437] %v452
          %v454 = vld [vmem:[%s444 + $0x20] sm:%s437]
          %455 = vst [vmem:[%s445 + $0x20] sm:%s437] %v454
          %v456 = vld [vmem:[%s444 + $0x28] sm:%s437]
          %457 = vst [vmem:[%s445 + $0x28] sm:%s437] %v456
        $region192: #{xlnet_mlp_head.1} parent=186 // loop_footer
          %s443 = sadd.s32 1, %s439
        $region193: #{xlnet_mlp_head.1} parent=186 // loop_footer_branch
          %438 = sbr.rel target = $region189
        $region194: #{xlnet_mlp_head.1} parent=186 // loop_exit
          _
      $region187: #{xlnet_mlp_head.1} parent=178 // pred_fallthru
        _
      // Predicated region
      $region206: #{xlnet_mlp_head.1} parent=178 // pred_check
        _
      $region207: #{xlnet_mlp_head.1} parent=178 // pred_check_branch
        %484 = sbr.rel (0) target = $region209
      $region208: #{xlnet_mlp_head.1} parent=178 // pred_region
        %485 = vsyncadd [#allocation3], 96
      $region209: #{xlnet_mlp_head.1} parent=178 // pred_fallthru
        _
    $region179: #{xlnet_mlp_head.1} parent=12 // pred_fallthru
      _
    %s486 = sadd.s32 %s45, 6
    %p487 = scmp.lt.s32.totalorder %s486, 2
    // Predicated region
    $region210: #{xlnet_mlp_head.1} parent=12 // pred_check
      %p488 = pneg %p487
    $region211: #{xlnet_mlp_head.1} parent=12 // pred_check_branch
      %490 = sbr.rel (%p488) target = $region213
    $region212: #{xlnet_mlp_head.1} parent=12 // pred_region
      %s491 = sld [smem:[#allocation5 + %s486]]
      %p492 = scmp.ge.s32.totalorder %s491, 1
      %s493 = ssub.s32 %s491, 1
      %s494 = scalar_select %p492, %s493, 7
      %p495 = scmp.gt.s32.totalorder %s494, 0
      %s496 = scalar_select %p495, %s494, 0
      %p497 = scmp.lt.s32.totalorder %s496, 7
      %s498 = scalar_select %p497, %s496, 7
      %s499 = sshrl.u32 %s498, 3
      %s500 = sand.u32 %s498, 7
      %s501 = smul.u32 %s499, 48
      %s502 = sadd.s32 %s500, %s501
      %s503 = smul.u32 %s486, 48
      %s504 = sadd.s32 %s502, %s503
      %s505 = scalar_lea.vmem %s1, %s504
      %s506 = scalar_lea.vmem [#allocation2], 6
      // Predicated region
      $region214: #{xlnet_mlp_head.1} parent=212 // pred_check
        _
      $region215: #{xlnet_mlp_head.1} parent=212 // pred_check_branch
        %508 = sbr.rel target = $region217
      $region216: #{xlnet_mlp_head.1} parent=212 // pred_region
        // Predicated region
        $region229: #{xlnet_mlp_head.1} parent=216 // pred_check
          _
        $region230: #{xlnet_mlp_head.1} parent=216 // pred_check_branch
          %534 = sbr.rel (0) target = $region232
        $region231: #{xlnet_mlp_head.1} parent=216 // pred_region
          %s536 = ssub.s32 2, 1
          loop: start=0, step=1, limit=1
          $region233: #{xlnet_mlp_head.1} parent=231 // loop_pre_header
            _
          $region234: #{xlnet_mlp_head.1} parent=231 // loop_header
            %s538 = sphi 0, %s542
            %p539 = scmp.ge.s32.totalorder %s538, 1
            %s543 = sphi %s505, %s505
            %s544 = sphi %s506, %s506
          $region235: #{xlnet_mlp_head.1} parent=231 // loop_header_branch
            %541 = sbr.rel (%p539) target = $region239
          $region236: #{xlnet_mlp_head.1} parent=231 // loop_body
            %v545 = vld [vmem:[%s543] sm:%s536]
            %546 = vst [vmem:[%s544] sm:%s536] %v545
            %v547 = vld [vmem:[%s543 + $0x8] sm:%s536]
            %548 = vst [vmem:[%s544 + $0x8] sm:%s536] %v547
            %v549 = vld [vmem:[%s543 + $0x10] sm:%s536]
            %550 = vst [vmem:[%s544 + $0x10] sm:%s536] %v549
            %v551 = vld [vmem:[%s543 + $0x18] sm:%s536]
            %552 = vst [vmem:[%s544 + $0x18] sm:%s536] %v551
            %v553 = vld [vmem:[%s543 + $0x20] sm:%s536]
            %554 = vst [vmem:[%s544 + $0x20] sm:%s536] %v553
            %v555 = vld [vmem:[%s543 + $0x28] sm:%s536]
            %556 = vst [vmem:[%s544 + $0x28] sm:%s536] %v555
          $region237: #{xlnet_mlp_head.1} parent=231 // loop_footer
            %s542 = sadd.s32 1, %s538
          $region238: #{xlnet_mlp_head.1} parent=231 // loop_footer_branch
            %537 = sbr.rel target = $region234
          $region239: #{xlnet_mlp_head.1} parent=231 // loop_exit
            _
        $region232: #{xlnet_mlp_head.1} parent=216 // pred_fallthru
          _
      $region217: #{xlnet_mlp_head.1} parent=212 // pred_fallthru
        _
      // Predicated region
      $region218: #{xlnet_mlp_head.1} parent=212 // pred_check
        _
      $region219: #{xlnet_mlp_head.1} parent=212 // pred_check_branch
        %510 = sbr.rel (0) target = $region221
      $region220: #{xlnet_mlp_head.1} parent=212 // pred_region
        %s512 = ssub.s32 2, 1
        loop: start=0, step=1, limit=1
        $region222: #{xlnet_mlp_head.1} parent=220 // loop_pre_header
          _
        $region223: #{xlnet_mlp_head.1} parent=220 // loop_header
          %s514 = sphi 0, %s518
          %p515 = scmp.ge.s32.totalorder %s514, 1
          %s519 = sphi %s505, %s505
          %s520 = sphi %s506, %s506
        $region224: #{xlnet_mlp_head.1} parent=220 // loop_header_branch
          %517 = sbr.rel (%p515) target = $region228
        $region225: #{xlnet_mlp_head.1} parent=220 // loop_body
          %v521 = vld [vmem:[%s519] sm:%s512]
          %522 = vst [vmem:[%s520] sm:%s512] %v521
          %v523 = vld [vmem:[%s519 + $0x8] sm:%s512]
          %524 = vst [vmem:[%s520 + $0x8] sm:%s512] %v523
          %v525 = vld [vmem:[%s519 + $0x10] sm:%s512]
          %526 = vst [vmem:[%s520 + $0x10] sm:%s512] %v525
          %v527 = vld [vmem:[%s519 + $0x18] sm:%s512]
          %528 = vst [vmem:[%s520 + $0x18] sm:%s512] %v527
          %v529 = vld [vmem:[%s519 + $0x20] sm:%s512]
          %530 = vst [vmem:[%s520 + $0x20] sm:%s512] %v529
          %v531 = vld [vmem:[%s519 + $0x28] sm:%s512]
          %532 = vst [vmem:[%s520 + $0x28] sm:%s512] %v531
        $region226: #{xlnet_mlp_head.1} parent=220 // loop_footer
          %s518 = sadd.s32 1, %s514
        $region227: #{xlnet_mlp_head.1} parent=220 // loop_footer_branch
          %513 = sbr.rel target = $region223
        $region228: #{xlnet_mlp_head.1} parent=220 // loop_exit
          _
      $region221: #{xlnet_mlp_head.1} parent=212 // pred_fallthru
        _
      // Predicated region
      $region240: #{xlnet_mlp_head.1} parent=212 // pred_check
        _
      $region241: #{xlnet_mlp_head.1} parent=212 // pred_check_branch
        %559 = sbr.rel (0) target = $region243
      $region242: #{xlnet_mlp_head.1} parent=212 // pred_region
        %560 = vsyncadd [#allocation3], 96
      $region243: #{xlnet_mlp_head.1} parent=212 // pred_fallthru
        _
    $region213: #{xlnet_mlp_head.1} parent=12 // pred_fallthru
      _
    %s561 = sadd.s32 %s45, 7
    %p562 = scmp.lt.s32.totalorder %s561, 2
    // Predicated region
    $region244: #{xlnet_mlp_head.1} parent=12 // pred_check
      %p563 = pneg %p562
    $region245: #{xlnet_mlp_head.1} parent=12 // pred_check_branch
      %565 = sbr.rel (%p563) target = $region247
    $region246: #{xlnet_mlp_head.1} parent=12 // pred_region
      %s566 = sld [smem:[#allocation5 + %s561]]
      %p567 = scmp.ge.s32.totalorder %s566, 1
      %s568 = ssub.s32 %s566, 1
      %s569 = scalar_select %p567, %s568, 7
      %p570 = scmp.gt.s32.totalorder %s569, 0
      %s571 = scalar_select %p570, %s569, 0
      %p572 = scmp.lt.s32.totalorder %s571, 7
      %s573 = scalar_select %p572, %s571, 7
      %s574 = sshrl.u32 %s573, 3
      %s575 = sand.u32 %s573, 7
      %s576 = smul.u32 %s574, 48
      %s577 = sadd.s32 %s575, %s576
      %s578 = smul.u32 %s561, 48
      %s579 = sadd.s32 %s577, %s578
      %s580 = scalar_lea.vmem %s1, %s579
      %s581 = scalar_lea.vmem [#allocation2], 7
      // Predicated region
      $region248: #{xlnet_mlp_head.1} parent=246 // pred_check
        _
      $region249: #{xlnet_mlp_head.1} parent=246 // pred_check_branch
        %583 = sbr.rel target = $region251
      $region250: #{xlnet_mlp_head.1} parent=246 // pred_region
        // Predicated region
        $region263: #{xlnet_mlp_head.1} parent=250 // pred_check
          _
        $region264: #{xlnet_mlp_head.1} parent=250 // pred_check_branch
          %609 = sbr.rel (0) target = $region266
        $region265: #{xlnet_mlp_head.1} parent=250 // pred_region
          %s611 = ssub.s32 2, 1
          loop: start=0, step=1, limit=1
          $region267: #{xlnet_mlp_head.1} parent=265 // loop_pre_header
            _
          $region268: #{xlnet_mlp_head.1} parent=265 // loop_header
            %s613 = sphi 0, %s617
            %p614 = scmp.ge.s32.totalorder %s613, 1
            %s618 = sphi %s580, %s580
            %s619 = sphi %s581, %s581
          $region269: #{xlnet_mlp_head.1} parent=265 // loop_header_branch
            %616 = sbr.rel (%p614) target = $region273
          $region270: #{xlnet_mlp_head.1} parent=265 // loop_body
            %v620 = vld [vmem:[%s618] sm:%s611]
            %621 = vst [vmem:[%s619] sm:%s611] %v620
            %v622 = vld [vmem:[%s618 + $0x8] sm:%s611]
            %623 = vst [vmem:[%s619 + $0x8] sm:%s611] %v622
            %v624 = vld [vmem:[%s618 + $0x10] sm:%s611]
            %625 = vst [vmem:[%s619 + $0x10] sm:%s611] %v624
            %v626 = vld [vmem:[%s618 + $0x18] sm:%s611]
            %627 = vst [vmem:[%s619 + $0x18] sm:%s611] %v626
            %v628 = vld [vmem:[%s618 + $0x20] sm:%s611]
            %629 = vst [vmem:[%s619 + $0x20] sm:%s611] %v628
            %v630 = vld [vmem:[%s618 + $0x28] sm:%s611]
            %631 = vst [vmem:[%s619 + $0x28] sm:%s611] %v630
          $region271: #{xlnet_mlp_head.1} parent=265 // loop_footer
            %s617 = sadd.s32 1, %s613
          $region272: #{xlnet_mlp_head.1} parent=265 // loop_footer_branch
            %612 = sbr.rel target = $region268
          $region273: #{xlnet_mlp_head.1} parent=265 // loop_exit
            _
        $region266: #{xlnet_mlp_head.1} parent=250 // pred_fallthru
          _
      $region251: #{xlnet_mlp_head.1} parent=246 // pred_fallthru
        _
      // Predicated region
      $region252: #{xlnet_mlp_head.1} parent=246 // pred_check
        _
      $region253: #{xlnet_mlp_head.1} parent=246 // pred_check_branch
        %585 = sbr.rel (0) target = $region255
      $region254: #{xlnet_mlp_head.1} parent=246 // pred_region
        %s587 = ssub.s32 2, 1
        loop: start=0, step=1, limit=1
        $region256: #{xlnet_mlp_head.1} parent=254 // loop_pre_header
          _
        $region257: #{xlnet_mlp_head.1} parent=254 // loop_header
          %s589 = sphi 0, %s593
          %p590 = scmp.ge.s32.totalorder %s589, 1
          %s594 = sphi %s580, %s580
          %s595 = sphi %s581, %s581
        $region258: #{xlnet_mlp_head.1} parent=254 // loop_header_branch
          %592 = sbr.rel (%p590) target = $region262
        $region259: #{xlnet_mlp_head.1} parent=254 // loop_body
          %v596 = vld [vmem:[%s594] sm:%s587]
          %597 = vst [vmem:[%s595] sm:%s587] %v596
          %v598 = vld [vmem:[%s594 + $0x8] sm:%s587]
          %599 = vst [vmem:[%s595 + $0x8] sm:%s587] %v598
          %v600 = vld [vmem:[%s594 + $0x10] sm:%s587]
          %601 = vst [vmem:[%s595 + $0x10] sm:%s587] %v600
          %v602 = vld [vmem:[%s594 + $0x18] sm:%s587]
          %603 = vst [vmem:[%s595 + $0x18] sm:%s587] %v602
          %v604 = vld [vmem:[%s594 + $0x20] sm:%s587]
          %605 = vst [vmem:[%s595 + $0x20] sm:%s587] %v604
          %v606 = vld [vmem:[%s594 + $0x28] sm:%s587]
          %607 = vst [vmem:[%s595 + $0x28] sm:%s587] %v606
        $region260: #{xlnet_mlp_head.1} parent=254 // loop_footer
          %s593 = sadd.s32 1, %s589
        $region261: #{xlnet_mlp_head.1} parent=254 // loop_footer_branch
          %588 = sbr.rel target = $region257
        $region262: #{xlnet_mlp_head.1} parent=254 // loop_exit
          _
      $region255: #{xlnet_mlp_head.1} parent=246 // pred_fallthru
        _
      // Predicated region
      $region274: #{xlnet_mlp_head.1} parent=246 // pred_check
        _
      $region275: #{xlnet_mlp_head.1} parent=246 // pred_check_branch
        %634 = sbr.rel (0) target = $region277
      $region276: #{xlnet_mlp_head.1} parent=246 // pred_region
        %635 = vsyncadd [#allocation3], 96
      $region277: #{xlnet_mlp_head.1} parent=246 // pred_fallthru
        _
    $region247: #{xlnet_mlp_head.1} parent=12 // pred_fallthru
      _
  $region13: #{xlnet_mlp_head.1} parent=0 // pred_fallthru
    _
  %s636 = scalar_lea.sflag [#allocation3], %s40
  %s637 = smul.u32 1, 6
  %s638 = sshll.u32 %s637, 4
  %639 = dma.done %s636, %s638
  %s640 = sshll.u32 %s637, 4
  %641 = dma.done %s636, %s640
  %s642 = smul.u32 %s32, 8
  %s643 = sadd.s32 %s642, 2
  %p644 = scmp.lt.s32.totalorder %s643, 2
  // Predicated region
  $region278: #{xlnet_mlp_head.1} parent=0 // pred_check
    %p645 = pneg %p644
  $region279: #{xlnet_mlp_head.1} parent=0 // pred_check_branch
    %647 = sbr.rel (%p645) target = $region281
  $region280: #{xlnet_mlp_head.1} parent=0 // pred_region
    %s648 = sshll.u32 %s637, 4
    %649 = dma.done %s636, %s648
  $region281: #{xlnet_mlp_head.1} parent=0 // pred_fallthru
    _
  %s650 = sadd.s32 %s642, 3
  %p651 = scmp.lt.s32.totalorder %s650, 2
  // Predicated region
  $region282: #{xlnet_mlp_head.1} parent=0 // pred_check
    %p652 = pneg %p651
  $region283: #{xlnet_mlp_head.1} parent=0 // pred_check_branch
    %654 = sbr.rel (%p652) target = $region285
  $region284: #{xlnet_mlp_head.1} parent=0 // pred_region
    %s655 = sshll.u32 %s637, 4
    %656 = dma.done %s636, %s655
  $region285: #{xlnet_mlp_head.1} parent=0 // pred_fallthru
    _
  %s657 = sadd.s32 %s642, 4
  %p658 = scmp.lt.s32.totalorder %s657, 2
  // Predicated region
  $region286: #{xlnet_mlp_head.1} parent=0 // pred_check
    %p659 = pneg %p658
  $region287: #{xlnet_mlp_head.1} parent=0 // pred_check_branch
    %661 = sbr.rel (%p659) target = $region289
  $region288: #{xlnet_mlp_head.1} parent=0 // pred_region
    %s662 = sshll.u32 %s637, 4
    %663 = dma.done %s636, %s662
  $region289: #{xlnet_mlp_head.1} parent=0 // pred_fallthru
    _
  %s664 = sadd.s32 %s642, 5
  %p665 = scmp.lt.s32.totalorder %s664, 2
  // Predicated region
  $region290: #{xlnet_mlp_head.1} parent=0 // pred_check
    %p666 = pneg %p665
  $region291: #{xlnet_mlp_head.1} parent=0 // pred_check_branch
    %668 = sbr.rel (%p666) target = $region293
  $region292: #{xlnet_mlp_head.1} parent=0 // pred_region
    %s669 = sshll.u32 %s637, 4
    %670 = dma.done %s636, %s669
  $region293: #{xlnet_mlp_head.1} parent=0 // pred_fallthru
    _
  %s671 = sadd.s32 %s642, 6
  %p672 = scmp.lt.s32.totalorder %s671, 2
  // Predicated region
  $region294: #{xlnet_mlp_head.1} parent=0 // pred_check
    %p673 = pneg %p672
  $region295: #{xlnet_mlp_head.1} parent=0 // pred_check_branch
    %675 = sbr.rel (%p673) target = $region297
  $region296: #{xlnet_mlp_head.1} parent=0 // pred_region
    %s676 = sshll.u32 %s637, 4
    %677 = dma.done %s636, %s676
  $region297: #{xlnet_mlp_head.1} parent=0 // pred_fallthru
    _
  %s678 = sadd.s32 %s642, 7
  %p679 = scmp.lt.s32.totalorder %s678, 2
  // Predicated region
  $region298: #{xlnet_mlp_head.1} parent=0 // pred_check
    %p680 = pneg %p679
  $region299: #{xlnet_mlp_head.1} parent=0 // pred_check_branch
    %682 = sbr.rel (%p680) target = $region301
  $region300: #{xlnet_mlp_head.1} parent=0 // pred_region
    %s683 = sshll.u32 %s637, 4
    %684 = dma.done %s636, %s683
  $region301: #{xlnet_mlp_head.1} parent=0 // pred_fallthru
    _
  %s685 = smul.u32 %s40, 6
  %s686 = smul.addr %s685, 8
  %s687 = scalar_lea.vmem [#allocation2], %s686
  %v688 = vld [vmem:[%s687] sm:$0xff]
  %v689 = vld [vmem:[%s687 + $0x8] sm:$0xff]
  %v690 = vld [vmem:[%s687 + $0x10] sm:$0xff]
  %v691 = vld [vmem:[%s687 + $0x18] sm:$0xff]
  %v692 = vld [vmem:[%s687 + $0x20] sm:$0xff]
  %v693 = vld [vmem:[%s687 + $0x28] sm:$0xff]
  %v694 = vld [vmem:[%s2] sm:$0xff]
  %v695 = vld [vmem:[%s2 + $0x8] sm:$0xff]
  %v696 = vld [vmem:[%s2 + $0x10] sm:$0xff]
  %v697 = vld [vmem:[%s2 + $0x18] sm:$0xff]
  %v698 = vld [vmem:[%s2 + $0x20] sm:$0xff]
  %v699 = vld [vmem:[%s2 + $0x28] sm:$0xff]
  %v700 = vld [vmem:[%s2 + $0x30] sm:$0xff]
  %v701 = vld [vmem:[%s2 + $0x38] sm:$0xff]
  %v702 = vld [vmem:[%s2 + $0x40] sm:$0xff]
  %v703 = vld [vmem:[%s2 + $0x48] sm:$0xff]
  %v704 = vld [vmem:[%s2 + $0x50] sm:$0xff]
  %v705 = vld [vmem:[%s2 + $0x58] sm:$0xff]
  %v706 = vld [vmem:[%s2 + $0x60] sm:$0xff]
  %v707 = vld [vmem:[%s2 + $0x68] sm:$0xff]
  %v708 = vld [vmem:[%s2 + $0x70] sm:$0xff]
  %v709 = vld [vmem:[%s2 + $0x78] sm:$0xff]
  %v710 = vld [vmem:[%s2 + $0x80] sm:$0xff]
  %v711 = vld [vmem:[%s2 + $0x88] sm:$0xff]
  %v712 = vld [vmem:[%s2 + $0x90] sm:$0xff]
  %v713 = vld [vmem:[%s2 + $0x98] sm:$0xff]
  %v714 = vld [vmem:[%s2 + $0xa0] sm:$0xff]
  %v715 = vld [vmem:[%s2 + $0xa8] sm:$0xff]
  %v716 = vld [vmem:[%s2 + $0xb0] sm:$0xff]
  %v717 = vld [vmem:[%s2 + $0xb8] sm:$0xff]
  %v718 = vld [vmem:[%s2 + $0xc0] sm:$0xff]
  %v719 = vld [vmem:[%s2 + $0xc8] sm:$0xff]
  %v720 = vld [vmem:[%s2 + $0xd0] sm:$0xff]
  %v721 = vld [vmem:[%s2 + $0xd8] sm:$0xff]
  %v722 = vld [vmem:[%s2 + $0xe0] sm:$0xff]
  %v723 = vld [vmem:[%s2 + $0xe8] sm:$0xff]
  %v724 = vld [vmem:[%s2 + $0xf0] sm:$0xff]
  %v725 = vld [vmem:[%s2 + $0xf8] sm:$0xff]
  %v726 = vld [vmem:[%s2 + $0x100] sm:$0xff]
  %v727 = vld [vmem:[%s2 + $0x108] sm:$0xff]
  %v728 = vld [vmem:[%s2 + $0x110] sm:$0xff]
  %v729 = vld [vmem:[%s2 + $0x118] sm:$0xff]
  %v730 = vld [vmem:[%s2 + $0x120] sm:$0xff]
  %v731 = vld [vmem:[%s2 + $0x128] sm:$0xff]
  %v732 = vld [vmem:[%s2 + $0x130] sm:$0xff]
  %v733 = vld [vmem:[%s2 + $0x138] sm:$0xff]
  %v734 = vld [vmem:[%s2 + $0x140] sm:$0xff]
  %v735 = vld [vmem:[%s2 + $0x148] sm:$0xff]
  %v736 = vld [vmem:[%s2 + $0x150] sm:$0xff]
  %v737 = vld [vmem:[%s2 + $0x158] sm:$0xff]
  %v738 = vld [vmem:[%s2 + $0x160] sm:$0xff]
  %v739 = vld [vmem:[%s2 + $0x168] sm:$0xff]
  %v740 = vld [vmem:[%s2 + $0x170] sm:$0xff]
  %v741 = vld [vmem:[%s2 + $0x178] sm:$0xff]
  %v742 = vld [vmem:[%s2 + $0x180] sm:$0xff]
  %v743 = vld [vmem:[%s2 + $0x188] sm:$0xff]
  %v744 = vld [vmem:[%s2 + $0x190] sm:$0xff]
  %v745 = vld [vmem:[%s2 + $0x198] sm:$0xff]
  %v746 = vld [vmem:[%s2 + $0x1a0] sm:$0xff]
  %v747 = vld [vmem:[%s2 + $0x1a8] sm:$0xff]
  %v748 = vld [vmem:[%s2 + $0x1b0] sm:$0xff]
  %v749 = vld [vmem:[%s2 + $0x1b8] sm:$0xff]
  %v750 = vld [vmem:[%s2 + $0x1c0] sm:$0xff]
  %v751 = vld [vmem:[%s2 + $0x1c8] sm:$0xff]
  %v752 = vld [vmem:[%s2 + $0x1d0] sm:$0xff]
  %v753 = vld [vmem:[%s2 + $0x1d8] sm:$0xff]
  %v754 = vld [vmem:[%s2 + $0x1e0] sm:$0xff]
  %v755 = vld [vmem:[%s2 + $0x1e8] sm:$0xff]
  %v756 = vld [vmem:[%s2 + $0x1f0] sm:$0xff]
  %v757 = vld [vmem:[%s2 + $0x1f8] sm:$0xff]
  %v758 = vld [vmem:[%s2 + $0x200] sm:$0xff]
  %v759 = vld [vmem:[%s2 + $0x208] sm:$0xff]
  %v760 = vld [vmem:[%s2 + $0x210] sm:$0xff]
  %v761 = vld [vmem:[%s2 + $0x218] sm:$0xff]
  %v762 = vld [vmem:[%s2 + $0x220] sm:$0xff]
  %v763 = vld [vmem:[%s2 + $0x228] sm:$0xff]
  %v764 = vld [vmem:[%s2 + $0x230] sm:$0xff]
  %v765 = vld [vmem:[%s2 + $0x238] sm:$0xff]
  %v766 = vld [vmem:[%s2 + $0x240] sm:$0xff]
  %v767 = vld [vmem:[%s2 + $0x248] sm:$0xff]
  %v768 = vld [vmem:[%s2 + $0x250] sm:$0xff]
  %v769 = vld [vmem:[%s2 + $0x258] sm:$0xff]
  %v770 = vld [vmem:[%s2 + $0x260] sm:$0xff]
  %v771 = vld [vmem:[%s2 + $0x268] sm:$0xff]
  %v772 = vld [vmem:[%s2 + $0x270] sm:$0xff]
  %v773 = vld [vmem:[%s2 + $0x278] sm:$0xff]
  %v774 = vld [vmem:[%s2 + $0x280] sm:$0xff]
  %v775 = vld [vmem:[%s2 + $0x288] sm:$0xff]
  %v776 = vld [vmem:[%s2 + $0x290] sm:$0xff]
  %v777 = vld [vmem:[%s2 + $0x298] sm:$0xff]
  %v778 = vld [vmem:[%s2 + $0x2a0] sm:$0xff]
  %v779 = vld [vmem:[%s2 + $0x2a8] sm:$0xff]
  %v780 = vld [vmem:[%s2 + $0x2b0] sm:$0xff]
  %v781 = vld [vmem:[%s2 + $0x2b8] sm:$0xff]
  %v782 = vld [vmem:[%s2 + $0x2c0] sm:$0xff]
  %v783 = vld [vmem:[%s2 + $0x2c8] sm:$0xff]
  %v784 = vld [vmem:[%s2 + $0x2d0] sm:$0xff]
  %v785 = vld [vmem:[%s2 + $0x2d8] sm:$0xff]
  %v786 = vld [vmem:[%s2 + $0x2e0] sm:$0xff]
  %v787 = vld [vmem:[%s2 + $0x2e8] sm:$0xff]
  %v788 = vld [vmem:[%s2 + $0x2f0] sm:$0xff]
  %v789 = vld [vmem:[%s2 + $0x2f8] sm:$0xff]
  %v790 = vld [vmem:[%s3] sm:$0x1]
  %v792 = vperm.slane %v790, 0
  %794 = vmatpush.msra.mxu0 %v709
  %795 = vmatpush.msra.mxu0 %v708
  %796 = vmatpush.msra.mxu0 %v707
  %797 = vmatpush.msra.mxu0 %v706
  %798 = vmatpush.msra.mxu0 %v705
  %799 = vmatpush.msra.mxu0 %v704
  %800 = vmatpush.msra.mxu0 %v703
  %801 = vmatpush.msra.mxu0 %v702
  %802 = vmatpush.msra.mxu0 %v701
  %803 = vmatpush.msra.mxu0 %v700
  %804 = vmatpush.msra.mxu0 %v699
  %805 = vmatpush.msra.mxu0 %v698
  %806 = vmatpush.msra.mxu0 %v697
  %807 = vmatpush.msra.mxu0 %v696
  %808 = vmatpush.msra.mxu0 %v695
  %809 = vmatpush.msra.mxu0 %v694
  %810 = vmatmul.f32.gmra.mxu0 %v688
  %v811 = vpop.f32.mrf.mxu0
  %v812 = vadd.f32 %v792, %v811
  %813 = vdwg.mxu0
  %814 = vmatpush.msra.mxu0 %v725
  %815 = vmatpush.msra.mxu0 %v724
  %816 = vmatpush.msra.mxu0 %v723
  %817 = vmatpush.msra.mxu0 %v722
  %818 = vmatpush.msra.mxu0 %v721
  %819 = vmatpush.msra.mxu0 %v720
  %820 = vmatpush.msra.mxu0 %v719
  %821 = vmatpush.msra.mxu0 %v718
  %822 = vmatpush.msra.mxu0 %v717
  %823 = vmatpush.msra.mxu0 %v716
  %824 = vmatpush.msra.mxu0 %v715
  %825 = vmatpush.msra.mxu0 %v714
  %826 = vmatpush.msra.mxu0 %v713
  %827 = vmatpush.msra.mxu0 %v712
  %828 = vmatpush.msra.mxu0 %v711
  %829 = vmatpush.msra.mxu0 %v710
  %830 = vmatmul.f32.gmra.mxu0 %v689
  %v831 = vpop.f32.mrf.mxu0
  %v832 = vadd.f32 %v812, %v831
  %833 = vdwg.mxu0
  %834 = vmatpush.msra.mxu0 %v741
  %835 = vmatpush.msra.mxu0 %v740
  %836 = vmatpush.msra.mxu0 %v739
  %837 = vmatpush.msra.mxu0 %v738
  %838 = vmatpush.msra.mxu0 %v737
  %839 = vmatpush.msra.mxu0 %v736
  %840 = vmatpush.msra.mxu0 %v735
  %841 = vmatpush.msra.mxu0 %v734
  %842 = vmatpush.msra.mxu0 %v733
  %843 = vmatpush.msra.mxu0 %v732
  %844 = vmatpush.msra.mxu0 %v731
  %845 = vmatpush.msra.mxu0 %v730
  %846 = vmatpush.msra.mxu0 %v729
  %847 = vmatpush.msra.mxu0 %v728
  %848 = vmatpush.msra.mxu0 %v727
  %849 = vmatpush.msra.mxu0 %v726
  %850 = vmatmul.f32.gmra.mxu0 %v690
  %v851 = vpop.f32.mrf.mxu0
  %v852 = vadd.f32 %v832, %v851
  %853 = vdwg.mxu0
  %854 = vmatpush.msra.mxu0 %v757
  %855 = vmatpush.msra.mxu0 %v756
  %856 = vmatpush.msra.mxu0 %v755
  %857 = vmatpush.msra.mxu0 %v754
  %858 = vmatpush.msra.mxu0 %v753
  %859 = vmatpush.msra.mxu0 %v752
  %860 = vmatpush.msra.mxu0 %v751
  %861 = vmatpush.msra.mxu0 %v750
  %862 = vmatpush.msra.mxu0 %v749
  %863 = vmatpush.msra.mxu0 %v748
  %864 = vmatpush.msra.mxu0 %v747
  %865 = vmatpush.msra.mxu0 %v746
  %866 = vmatpush.msra.mxu0 %v745
  %867 = vmatpush.msra.mxu0 %v744
  %868 = vmatpush.msra.mxu0 %v743
  %869 = vmatpush.msra.mxu0 %v742
  %870 = vmatmul.f32.gmra.mxu0 %v691
  %v871 = vpop.f32.mrf.mxu0
  %v872 = vadd.f32 %v852, %v871
  %873 = vdwg.mxu0
  %874 = vmatpush.msra.mxu0 %v773
  %875 = vmatpush.msra.mxu0 %v772
  %876 = vmatpush.msra.mxu0 %v771
  %877 = vmatpush.msra.mxu0 %v770
  %878 = vmatpush.msra.mxu0 %v769
  %879 = vmatpush.msra.mxu0 %v768
  %880 = vmatpush.msra.mxu0 %v767
  %881 = vmatpush.msra.mxu0 %v766
  %882 = vmatpush.msra.mxu0 %v765
  %883 = vmatpush.msra.mxu0 %v764
  %884 = vmatpush.msra.mxu0 %v763
  %885 = vmatpush.msra.mxu0 %v762
  %886 = vmatpush.msra.mxu0 %v761
  %887 = vmatpush.msra.mxu0 %v760
  %888 = vmatpush.msra.mxu0 %v759
  %889 = vmatpush.msra.mxu0 %v758
  %890 = vmatmul.f32.gmra.mxu0 %v692
  %v891 = vpop.f32.mrf.mxu0
  %v892 = vadd.f32 %v872, %v891
  %893 = vdwg.mxu0
  %894 = vmatpush.msra.mxu0 %v789
  %895 = vmatpush.msra.mxu0 %v788
  %896 = vmatpush.msra.mxu0 %v787
  %897 = vmatpush.msra.mxu0 %v786
  %898 = vmatpush.msra.mxu0 %v785
  %899 = vmatpush.msra.mxu0 %v784
  %900 = vmatpush.msra.mxu0 %v783
  %901 = vmatpush.msra.mxu0 %v782
  %902 = vmatpush.msra.mxu0 %v781
  %903 = vmatpush.msra.mxu0 %v780
  %904 = vmatpush.msra.mxu0 %v779
  %905 = vmatpush.msra.mxu0 %v778
  %906 = vmatpush.msra.mxu0 %v777
  %907 = vmatpush.msra.mxu0 %v776
  %908 = vmatpush.msra.mxu0 %v775
  %909 = vmatpush.msra.mxu0 %v774
  %910 = vmatmul.f32.gmra.mxu0 %v693
  %v911 = vpop.f32.mrf.mxu0
  %v912 = vadd.f32 %v892, %v911
  %913 = vdwg.mxu0
  %914 = vst [vmem:[%s30] sm:$0xff] %v912
  %s915 = sadd.s32 0, 0
  %p916 = scmp.lt.s32.totalorder %s915, 0
  %s917 = scalar_select %p916, %s915, 0
  %s918 = smul.addr %s917, 8
  %s919 = scalar_lea.vmem %s4, %s918
  // Predicated region
  $region302: #{xlnet_mlp_head.1} parent=0 // pred_check
    _
  $region303: #{xlnet_mlp_head.1} parent=0 // pred_check_branch
    %921 = sbr.rel (0) target = $region305
  $region304: #{xlnet_mlp_head.1} parent=0 // pred_region
    %s922 = sadd.s32 0, 0
  $region305: #{xlnet_mlp_head.1} parent=0 // pred_fallthru
    _
  // Predicated region
  $region306: #{xlnet_mlp_head.1} parent=0 // pred_check
    _
  $region307: #{xlnet_mlp_head.1} parent=0 // pred_check_branch
    %924 = sbr.rel (0) target = $region309
  $region308: #{xlnet_mlp_head.1} parent=0 // pred_region
    %s925 = sadd.s32 0, 0
    %p926 = scmp.lt.s32.totalorder %s925, 0
    %s927 = scalar_select %p926, %s925, 0
    %s928 = smul.addr %s927, 8
    %s929 = scalar_lea.vmem %s4, %s928
  $region309: #{xlnet_mlp_head.1} parent=0 // pred_fallthru
    _
  %930 = vsyncmov [#allocation3]
  %s931 = vpop.sfrf %930
  %p932 = scmp.eq.s32.totalorder %s931, 0
  %p933 = pneg %p932
  %935 = shalt.err (%p933)
  %s936 = scalar_lea.sflag [#allocation3], 1
  %937 = vsyncmov %s936
  %s938 = vpop.sfrf %937
  %p939 = scmp.eq.s32.totalorder %s938, 0
  %p940 = pneg %p939
  %942 = shalt.err (%p940)

</llo_original>
